<compile_context>
chip_gen: v7x
topology: tpu7x:2x2x1
jax: 0.10.0
libtpu: 0.0.40
codegen_flags: <defaults>
</compile_context>

<pallas_src>
import functools

import numpy as np
import jax
import jax.numpy as jnp
from jax import lax
from jax.experimental import pallas as pl
from jax.experimental.pallas import tpu as pltpu

WEIGHT = 0.001  # mixing weight used in the torch module


def discriminator_kernel(mask_ref, gen_ref, raw_ref, env_ref, envr_ref,
                         wcat_hbm, bias_ref, out_ref, wcat_vmem, dma_sem, *, n_h):
    N = mask_ref.shape[1]
    H = gen_ref.shape[1]            # lane-padded hidden dim (multiple of 128)
    OUT_W = out_ref.shape[1]

    # ---- (1) start the fused-weight DMA; it hides under everything up to gw2 -------
    wcp = pltpu.make_async_copy(wcat_hbm, wcat_vmem, dma_sem)
    wcp.start()

    # ---- cosine DFT basis generated on the fly --------------------------------------
    # fft(x).real == x @ C, ifft(y).real == y @ C / n_h with C[r,c] = cos(2*pi*r*c/n_h)
    rI = lax.broadcasted_iota(jnp.int32, (H, 1), 0)
    cI = lax.broadcasted_iota(jnp.int32, (1, H), 1)
    prod = (rI * cI).astype(jnp.float32)                 # exact in f32 for n_h <= 4096
    # float "mod n_h": a +-1 error in the quotient only shifts the angle by 2*pi
    q = jnp.floor(prod * jnp.float32(1.0 / n_h))
    rem = prod - q * jnp.float32(n_h)
    cosb = jnp.cos(rem * jnp.float32(2.0 * np.pi / n_h))                      # [H, H]
    if H != n_h:
        # only columns need masking: rows >= n_h always multiply zero-padded lanes
        cosb = jnp.where(jnp.broadcast_to(cI < n_h, (H, H)), cosb, 0.0)

    # ---- class means built in-kernel from the mask row -------------------------------
    m = mask_ref[...]                                     # [1, N], 1.0 where label==1
    n1 = jnp.sum(m, axis=1, keepdims=True)                # [1, 1]
    c1 = jnp.maximum(n1, 1.0)                             # empty-class guard (torch would NaN)
    c0 = jnp.maximum(jnp.float32(N) - n1, 1.0)
    pos_sel = m * (1.0 / c1)                              # [1, N]
    neg_sel = (1.0 - m) * (1.0 / c0)

    w = jnp.float32(WEIGHT)
    r8 = lax.broadcasted_iota(jnp.int32, (8, 1), 0)
    # cm row pattern: [pos, neg, neg, pos, a, b, b, a];  "pos-like" rows are 0,3,4,7
    pos_like = (r8 == 0) | (r8 == 3) | (r8 == 4) | (r8 == 7)
    sel = jnp.where(jnp.broadcast_to(pos_like, (8, N)),
                    jnp.broadcast_to(pos_sel, (8, N)),
                    jnp.broadcast_to(neg_sel, (8, N)))                        # [8, N]
    gen_scale = jnp.where(r8 < 4, 1.0, 2.0 * (1.0 - w))                       # [8, 1]
    raw_scale = jnp.where(r8 < 4, 0.0, 1.0 - w)

    cm = (jnp.dot(sel * gen_scale, gen_ref[...], preferred_element_type=jnp.float32) +
          jnp.dot(sel * raw_scale, raw_ref[...], preferred_element_type=jnp.float32))   # [8, H]
    sm = jnp.dot(cm, cosb, preferred_element_type=jnp.float32)                          # [8, H]
    # sm rows: 0 pos, 1 neg, 2 neg, 3 pos, 4 a, 5 b, 6 b, 7 a
    #   a = (1-w)*(2*pos + raw_pos),  b = (1-w)*(2*neg + raw_neg)

    # d = mean(gen_spectral) = (n1*pos + n0*neg)/N  (exact even under the empty-class guard)
    d = (n1 * sm[0:1, :] + (jnp.float32(N) - n1) * sm[1:2, :]) * jnp.float32(1.0 / N)

    # ---- (2) single merged iFFT matmul; Laplacian (I - diag(d)) is diagonal ----------
    r4 = lax.broadcasted_iota(jnp.int32, (4, 1), 0)
    factor = jnp.where(jnp.broadcast_to(r4 < 2, (4, H)),
                       jnp.broadcast_to(1.0 - d, (4, H)),
                       jnp.broadcast_to(d, (4, H)))
    iff4 = jnp.dot(sm[0:4, :] * factor, cosb,
                   preferred_element_type=jnp.float32) * jnp.float32(1.0 / n_h)
    # iff4 rows: [ih1, ih0, il0, il1]
    cv = 3.0 * w * iff4 + sm[4:8, :]          # bilinear LHS per (head, class)      [4, H]

    # ---- bilinear heads: one fused projection for both -------------------------------
    wcp.wait()
    gw2 = jnp.dot(gen_ref[...], wcat_vmem[...], preferred_element_type=jnp.float32)  # [N, 2H]
    g_w = gw2[:, 0:H]                                     # gen @ Wk^T
    g_wenv = gw2[:, H:2 * H]                              # gen @ Wenv^T

    # x1^T W x2 + b == sum(x1 * (x2 @ W^T)) + b;  2*f_k(s,g)+f_k(rs,g) == f_k(2s+rs,g)+2b
    sc = lax.dot_general(cv, g_w, (((1,), (1,)), ((), ())),
                         preferred_element_type=jnp.float32)                         # [4, N]

    envc = (2.0 * env_ref[...] + envr_ref[...]) * jnp.float32(1.0 / 3.0)
    env_row = lax.dot_general(jnp.ones((1, H), jnp.float32), envc * g_wenv,
                              (((1,), (1,)), ((), ())),
                              preferred_element_type=jnp.float32)                    # [1, N]

    is1 = m > 0.5
    bk3 = 3.0 * bias_ref[0, 0]
    benv = bias_ref[0, 1]

    # single lane-padded output row: [pos logits | neg logits | env logits | zero pad]
    if OUT_W > 3 * N:
        out_ref[:, 3 * N:] = jnp.zeros((1, OUT_W - 3 * N), jnp.float32)
    out_ref[:, 0:N] = jnp.where(is1, sc[0:1, :], sc[1:2, :]) + bk3
    out_ref[:, N:2 * N] = jnp.where(is1, sc[2:3, :], sc[3:4, :]) + bk3
    out_ref[:, 2 * N:3 * N] = env_row + benv


def _round_up(x, m):
    return ((x + m - 1) // m) * m


def discriminator_forward(gen_feats, raw_feats, env_feats, env_raw_feats, labels,
                          w_fk, b_fk, w_fk_env, b_fk_env):
    """Returns (context_logits [2N,1], env_logits [N,1]) — matches Discriminator.forward."""
    N, n_h = gen_feats.shape
    H = _round_up(n_h, 128)
    pad = H - n_h

    def _pad_feats(a):
        a = jnp.asarray(a, jnp.float32)
        return jnp.pad(a, ((0, 0), (0, pad))) if pad else a

    gen = _pad_feats(gen_feats)
    raw = _pad_feats(raw_feats)
    env = _pad_feats(env_feats)
    envr = _pad_feats(env_raw_feats)
    mask_row = (jnp.asarray(labels) == 1).astype(jnp.float32).reshape(1, N)

    def _pad_wT(wt):
        wt = jnp.asarray(wt, jnp.float32).T
        return jnp.pad(wt, ((0, pad), (0, pad))) if pad else wt

    # fused bilinear weights [Wk^T | Wenv^T] -> one gen @ wcat matmul in the kernel
    wcat = jnp.concatenate([_pad_wT(w_fk), _pad_wT(w_fk_env)], axis=1)        # [H, 2H]
    bias = jnp.concatenate([jnp.asarray(b_fk, jnp.float32).reshape(1, 1),
                            jnp.asarray(b_fk_env, jnp.float32).reshape(1, 1)], axis=1)

    out_w = _round_up(3 * N, 128)

    # explicit VMEM budget: cosb temp + fused-weight scratch + features + slack
    vmem_bytes = 4 * (3 * H * H + 8 * N * H + 8 * H + out_w) + (4 << 20)
    vmem_limit = int(min(max(vmem_bytes, 32 << 20), 64 << 20))

    vmem = pl.BlockSpec(memory_space=pltpu.MemorySpace.VMEM)
    smem = pl.BlockSpec(memory_space=pltpu.MemorySpace.SMEM)

    out_row = pl.pallas_call(
        functools.partial(discriminator_kernel, n_h=n_h),
        out_shape=jax.ShapeDtypeStruct((1, out_w), jnp.float32),
        in_specs=[vmem, vmem, vmem, vmem, vmem,
                  pl.BlockSpec(memory_space=pl.ANY),    # weights stay in HBM, DMA'd in-kernel
                  smem],
        out_specs=vmem,
        scratch_shapes=[pltpu.VMEM((H, 2 * H), jnp.float32),
                        pltpu.SemaphoreType.DMA(())],
        compiler_params=pltpu.CompilerParams(vmem_limit_bytes=vmem_limit),
    )(mask_row, gen, raw, env, envr, wcat, bias)

    ctx = out_row[0, :2 * N].reshape(2 * N, 1)
    envl = out_row[0, 2 * N:3 * N].reshape(N, 1)
    return ctx, envl


def _reference_np(gen, raw, env, env_raw, labels, Wk, bk, Wenv, benv):
    """Pure numpy re-implementation of the torch forward for verification."""
    gen = np.asarray(gen, np.float32)
    raw = np.asarray(raw, np.float32)
    env = np.asarray(env, np.float32)
    env_raw = np.asarray(env_raw, np.float32)
    labels = np.asarray(labels)
    Wk = np.asarray(Wk, np.float32)
    Wenv = np.asarray(Wenv, np.float32)
    H = gen.shape[1]

    gs = np.fft.fft(gen, axis=-1).real.astype(np.float32)
    rs = np.fft.fft(raw, axis=-1).real.astype(np.float32)
    i1 = labels == 1
    i0 = ~i1
    pos = gs[i1].mean(0, keepdims=True)
    neg = gs[i0].mean(0, keepdims=True)
    rpos = rs[i1].mean(0, keepdims=True)
    rneg = rs[i0].mean(0, keepdims=True)
    d = gs.mean(0)
    L = np.eye(H, dtype=np.float32) - np.diag(d)
    high = (L @ gs.T).T
    low = gs - high
    ih1 = np.fft.ifft(high[i1].mean(0, keepdims=True), axis=-1).real.astype(np.float32)
    ih0 = np.fft.ifft(high[i0].mean(0, keepdims=True), axis=-1).real.astype(np.float32)
    il1 = np.fft.ifft(low[i1].mean(0, keepdims=True), axis=-1).real.astype(np.float32)
    il0 = np.fft.ifft(low[i0].mean(0, keepdims=True), axis=-1).real.astype(np.float32)
    w = WEIGHT
    sel = i1[:, None]
    ps = np.where(sel, w * ih1 + (1 - w) * pos, w * ih0 + (1 - w) * neg)
    rps = np.where(sel, w * ih1 + (1 - w) * rpos, w * ih0 + (1 - w) * rneg)
    ns = np.where(sel, w * il0 + (1 - w) * neg, w * il1 + (1 - w) * pos)
    rns = np.where(sel, w * il0 + (1 - w) * rneg, w * il1 + (1 - w) * rpos)

    def bil(x1, x2, W, b):
        return ((x1 @ W) * x2).sum(-1, keepdims=True) + b

    l1 = 2 * bil(ps, gen, Wk, bk) + bil(rps, gen, Wk, bk)
    l2 = 2 * bil(ns, gen, Wk, bk) + bil(rns, gen, Wk, bk)
    ctx = np.concatenate([l1, l2], axis=0)
    envc = (2 * env + env_raw) / 3
    envl = bil(envc, gen, Wenv, benv)
    return ctx, envl


if __name__ == "__main__":
    N, n_h = 8, 32          # batch=8, hidden=32
    key = jax.random.PRNGKey(0)
    k1, k2, k3, k4, k5, k6 = jax.random.split(key, 6)

    gen_feats = jax.random.normal(k1, (N, n_h), jnp.float32)
    raw_feats = jax.random.normal(k2, (N, n_h), jnp.float32)
    env_feats = jax.random.normal(k3, (N, n_h), jnp.float32)
    env_raw_feats = jax.random.normal(k4, (N, n_h), jnp.float32)
    labels = jnp.array([1, 0, 1, 1, 0, 0, 1, 0], jnp.int32)

    # nn.Bilinear(n_h, n_h, 1) weights (xavier_uniform_), bias filled with 0.0
    bound = float(np.sqrt(6.0 / (n_h * n_h + n_h)))
    w_fk = jax.random.uniform(k5, (n_h, n_h), jnp.float32, -bound, bound)
    w_fk_env = jax.random.uniform(k6, (n_h, n_h), jnp.float32, -bound, bound)
    b_fk = 0.0
    b_fk_env = 0.0

    ctx_logits, env_logits = discriminator_forward(
        gen_feats, raw_feats, env_feats, env_raw_feats, labels,
        w_fk, b_fk, w_fk_env, b_fk_env)
    jax.block_until_ready((ctx_logits, env_logits))

    ctx_ref, env_ref = _reference_np(
        gen_feats, raw_feats, env_feats, env_raw_feats, labels,
        w_fk, b_fk, w_fk_env, b_fk_env)
    np.testing.assert_allclose(np.asarray(ctx_logits), ctx_ref, rtol=2e-3, atol=2e-3)
    np.testing.assert_allclose(np.asarray(env_logits), env_ref, rtol=2e-3, atol=2e-3)

    print("KERNEL_OK")
</pallas_src>

<mosaic_0001>
module attributes {stable_mosaic.version = 11 : i64} {
  func.func @discriminator_kernel(%arg0: memref<1x8xf32, #tpu.memory_space<vmem>>, %arg1: memref<8x128xf32, #tpu.memory_space<vmem>>, %arg2: memref<8x128xf32, #tpu.memory_space<vmem>>, %arg3: memref<8x128xf32, #tpu.memory_space<vmem>>, %arg4: memref<8x128xf32, #tpu.memory_space<vmem>>, %arg5: memref<128x256xf32, #tpu.memory_space<any>>, %arg6: memref<1x2xf32, #tpu.memory_space<smem>>, %arg7: memref<1x128xf32, #tpu.memory_space<vmem>>, %arg8: memref<128x256xf32, #tpu.memory_space<vmem>>, %arg9: memref<!tpu.dma_semaphore, #tpu.memory_space<semaphore_mem>>) attributes {dimension_semantics = [], scalar_prefetch = 0 : i64, scratch_operands = 2 : i64, tpu.core_type = #tpu.core_type<tc>} {
    tpu.enqueue_dma source(%arg5 : memref<128x256xf32, #tpu.memory_space<any>>) target(%arg8 : memref<128x256xf32, #tpu.memory_space<vmem>>) target_semaphore(%arg9 : memref<!tpu.dma_semaphore, #tpu.memory_space<semaphore_mem>>)
    %0 = tpu.iota {dimensions = array<i32: 0>} : vector<128x1xi32>
    %1 = tpu.iota {dimensions = array<i32: 1>} : vector<1x128xi32>
    %2 = vector.broadcast %0 : vector<128x1xi32> to vector<128x128xi32>
    %3 = vector.broadcast %1 : vector<1x128xi32> to vector<128x128xi32>
    %4 = arith.muli %2, %3 : vector<128x128xi32>
    %5 = arith.sitofp %4 : vector<128x128xi32> to vector<128x128xf32>
    %cst = arith.constant 3.125000e-02 : f32
    %6 = vector.broadcast %cst : f32 to vector<128x128xf32>
    %7 = arith.mulf %5, %6 : vector<128x128xf32>
    %8 = math.floor %7 : vector<128x128xf32>
    %cst_0 = arith.constant 3.200000e+01 : f32
    %9 = vector.broadcast %cst_0 : f32 to vector<128x128xf32>
    %10 = arith.mulf %8, %9 : vector<128x128xf32>
    %11 = arith.subf %5, %10 : vector<128x128xf32>
    %cst_1 = arith.constant 0.196349546 : f32
    %12 = vector.broadcast %cst_1 : f32 to vector<128x128xf32>
    %13 = arith.mulf %11, %12 : vector<128x128xf32>
    %14 = math.cos %13 : vector<128x128xf32>
    %c32_i32 = arith.constant 32 : i32
    %15 = vector.broadcast %c32_i32 : i32 to vector<1x128xi32>
    %16 = arith.cmpi slt, %1, %15 : vector<1x128xi32>
    %17 = vector.shape_cast %16 : vector<1x128xi1> to vector<1x128xi1>
    %18 = vector.broadcast %17 : vector<1x128xi1> to vector<128x128xi1>
    %cst_2 = arith.constant 0.000000e+00 : f32
    %19 = vector.broadcast %cst_2 : f32 to vector<128x128xf32>
    %20 = arith.select %18, %14, %19 : vector<128x128xi1>, vector<128x128xf32>
    %c0 = arith.constant 0 : index
    %c0_3 = arith.constant 0 : index
    %21 = vector.load %arg0[%c0, %c0_3] : memref<1x8xf32, #tpu.memory_space<vmem>>, vector<1x8xf32>
    %cst_4 = arith.constant dense<0.000000e+00> : vector<1xf32>
    %22 = vector.multi_reduction <add>, %21, %cst_4 [1] : vector<1x8xf32> to vector<1xf32>
    %23 = vector.shape_cast %22 : vector<1xf32> to vector<1x1xf32>
    %cst_5 = arith.constant 1.000000e+00 : f32
    %24 = vector.broadcast %cst_5 : f32 to vector<1x1xf32>
    %25 = arith.maximumf %23, %24 : vector<1x1xf32>
    %cst_6 = arith.constant 8.000000e+00 : f32
    %26 = vector.broadcast %cst_6 : f32 to vector<1x1xf32>
    %27 = arith.subf %26, %23 : vector<1x1xf32>
    %cst_7 = arith.constant 1.000000e+00 : f32
    %28 = vector.broadcast %cst_7 : f32 to vector<1x1xf32>
    %29 = arith.maximumf %27, %28 : vector<1x1xf32>
    %cst_8 = arith.constant 1.000000e+00 : f32
    %30 = vector.broadcast %cst_8 : f32 to vector<1x1xf32>
    %31 = arith.divf %30, %25 : vector<1x1xf32>
    %32 = vector.broadcast %31 : vector<1x1xf32> to vector<1x8xf32>
    %33 = arith.mulf %21, %32 : vector<1x8xf32>
    %cst_9 = arith.constant 1.000000e+00 : f32
    %34 = vector.broadcast %cst_9 : f32 to vector<1x8xf32>
    %35 = arith.subf %34, %21 : vector<1x8xf32>
    %cst_10 = arith.constant 1.000000e+00 : f32
    %36 = vector.broadcast %cst_10 : f32 to vector<1x1xf32>
    %37 = arith.divf %36, %29 : vector<1x1xf32>
    %38 = vector.broadcast %37 : vector<1x1xf32> to vector<1x8xf32>
    %39 = arith.mulf %35, %38 : vector<1x8xf32>
    %40 = tpu.iota {dimensions = array<i32: 0>} : vector<8x1xi32>
    %c0_i32 = arith.constant 0 : i32
    %41 = vector.broadcast %c0_i32 : i32 to vector<8x1xi32>
    %42 = arith.cmpi eq, %40, %41 : vector<8x1xi32>
    %c3_i32 = arith.constant 3 : i32
    %43 = vector.broadcast %c3_i32 : i32 to vector<8x1xi32>
    %44 = arith.cmpi eq, %40, %43 : vector<8x1xi32>
    %45 = arith.ori %42, %44 : vector<8x1xi1>
    %c4_i32 = arith.constant 4 : i32
    %46 = vector.broadcast %c4_i32 : i32 to vector<8x1xi32>
    %47 = arith.cmpi eq, %40, %46 : vector<8x1xi32>
    %48 = arith.ori %45, %47 : vector<8x1xi1>
    %c7_i32 = arith.constant 7 : i32
    %49 = vector.broadcast %c7_i32 : i32 to vector<8x1xi32>
    %50 = arith.cmpi eq, %40, %49 : vector<8x1xi32>
    %51 = arith.ori %48, %50 : vector<8x1xi1>
    %52 = vector.shape_cast %51 : vector<8x1xi1> to vector<8x1xi1>
    %53 = vector.broadcast %52 : vector<8x1xi1> to vector<8x8xi1>
    %54 = vector.shape_cast %33 : vector<1x8xf32> to vector<1x8xf32>
    %55 = vector.broadcast %54 : vector<1x8xf32> to vector<8x8xf32>
    %56 = vector.shape_cast %39 : vector<1x8xf32> to vector<1x8xf32>
    %57 = vector.broadcast %56 : vector<1x8xf32> to vector<8x8xf32>
    %58 = arith.select %53, %55, %57 : vector<8x8xi1>, vector<8x8xf32>
    %c4_i32_11 = arith.constant 4 : i32
    %59 = vector.broadcast %c4_i32_11 : i32 to vector<8x1xi32>
    %60 = arith.cmpi slt, %40, %59 : vector<8x1xi32>
    %cst_12 = arith.constant 1.000000e+00 : f32
    %cst_13 = arith.constant 1.000000e-03 : f32
    %61 = arith.subf %cst_12, %cst_13 : f32
    %cst_14 = arith.constant 2.000000e+00 : f32
    %62 = arith.mulf %cst_14, %61 : f32
    %cst_15 = arith.constant 1.000000e+00 : f32
    %63 = vector.broadcast %cst_15 : f32 to vector<8x1xf32>
    %64 = vector.broadcast %62 : f32 to vector<8x1xf32>
    %65 = arith.select %60, %63, %64 : vector<8x1xi1>, vector<8x1xf32>
    %c4_i32_16 = arith.constant 4 : i32
    %66 = vector.broadcast %c4_i32_16 : i32 to vector<8x1xi32>
    %67 = arith.cmpi slt, %40, %66 : vector<8x1xi32>
    %cst_17 = arith.constant 1.000000e+00 : f32
    %cst_18 = arith.constant 1.000000e-03 : f32
    %68 = arith.subf %cst_17, %cst_18 : f32
    %cst_19 = arith.constant 0.000000e+00 : f32
    %69 = vector.broadcast %cst_19 : f32 to vector<8x1xf32>
    %70 = vector.broadcast %68 : f32 to vector<8x1xf32>
    %71 = arith.select %67, %69, %70 : vector<8x1xi1>, vector<8x1xf32>
    %72 = vector.broadcast %65 : vector<8x1xf32> to vector<8x8xf32>
    %73 = arith.mulf %58, %72 : vector<8x8xf32>
    %c0_20 = arith.constant 0 : index
    %c0_21 = arith.constant 0 : index
    %74 = vector.load %arg1[%c0_20, %c0_21] : memref<8x128xf32, #tpu.memory_space<vmem>>, vector<8x128xf32>
    %cst_22 = arith.constant dense<0.000000e+00> : vector<8x128xf32>
    %75 = tpu.matmul %73, %74, %cst_22 {dimension_numbers = #tpu.dot_dimension_numbers<[1], [0], [0], [1], [0, 0, 1, 1], [], []>} : vector<8x8xf32>, vector<8x128xf32>, vector<8x128xf32> -> vector<8x128xf32>
    %76 = vector.broadcast %71 : vector<8x1xf32> to vector<8x8xf32>
    %77 = arith.mulf %58, %76 : vector<8x8xf32>
    %c0_23 = arith.constant 0 : index
    %c0_24 = arith.constant 0 : index
    %78 = vector.load %arg2[%c0_23, %c0_24] : memref<8x128xf32, #tpu.memory_space<vmem>>, vector<8x128xf32>
    %cst_25 = arith.constant dense<0.000000e+00> : vector<8x128xf32>
    %79 = tpu.matmul %77, %78, %cst_25 {dimension_numbers = #tpu.dot_dimension_numbers<[1], [0], [0], [1], [0, 0, 1, 1], [], []>} : vector<8x8xf32>, vector<8x128xf32>, vector<8x128xf32> -> vector<8x128xf32>
    %80 = arith.addf %75, %79 : vector<8x128xf32>
    %cst_26 = arith.constant dense<0.000000e+00> : vector<8x128xf32>
    %81 = tpu.matmul %80, %20, %cst_26 {dimension_numbers = #tpu.dot_dimension_numbers<[1], [0], [0], [1], [0, 0, 1, 1], [], []>} : vector<8x128xf32>, vector<128x128xf32>, vector<8x128xf32> -> vector<8x128xf32>
    %82 = vector.extract_strided_slice %81 {offsets = [0, 0], sizes = [1, 128], strides = [1, 1]} : vector<8x128xf32> to vector<1x128xf32>
    %83 = vector.broadcast %23 : vector<1x1xf32> to vector<1x128xf32>
    %84 = arith.mulf %83, %82 : vector<1x128xf32>
    %cst_27 = arith.constant 8.000000e+00 : f32
    %85 = vector.broadcast %cst_27 : f32 to vector<1x1xf32>
    %86 = arith.subf %85, %23 : vector<1x1xf32>
    %87 = vector.extract_strided_slice %81 {offsets = [1, 0], sizes = [1, 128], strides = [1, 1]} : vector<8x128xf32> to vector<1x128xf32>
    %88 = vector.broadcast %86 : vector<1x1xf32> to vector<1x128xf32>
    %89 = arith.mulf %88, %87 : vector<1x128xf32>
    %90 = arith.addf %84, %89 : vector<1x128xf32>
    %cst_28 = arith.constant 1.250000e-01 : f32
    %91 = vector.broadcast %cst_28 : f32 to vector<1x128xf32>
    %92 = arith.mulf %90, %91 : vector<1x128xf32>
    %93 = tpu.iota {dimensions = array<i32: 0>} : vector<4x1xi32>
    %c2_i32 = arith.constant 2 : i32
    %94 = vector.broadcast %c2_i32 : i32 to vector<4x1xi32>
    %95 = arith.cmpi slt, %93, %94 : vector<4x1xi32>
    %96 = vector.shape_cast %95 : vector<4x1xi1> to vector<4x1xi1>
    %97 = vector.broadcast %96 : vector<4x1xi1> to vector<4x128xi1>
    %cst_29 = arith.constant 1.000000e+00 : f32
    %98 = vector.broadcast %cst_29 : f32 to vector<1x128xf32>
    %99 = arith.subf %98, %92 : vector<1x128xf32>
    %100 = vector.shape_cast %99 : vector<1x128xf32> to vector<1x128xf32>
    %101 = vector.broadcast %100 : vector<1x128xf32> to vector<4x128xf32>
    %102 = vector.shape_cast %92 : vector<1x128xf32> to vector<1x128xf32>
    %103 = vector.broadcast %102 : vector<1x128xf32> to vector<4x128xf32>
    %104 = arith.select %97, %101, %103 : vector<4x128xi1>, vector<4x128xf32>
    %105 = vector.extract_strided_slice %81 {offsets = [0, 0], sizes = [4, 128], strides = [1, 1]} : vector<8x128xf32> to vector<4x128xf32>
    %106 = arith.mulf %105, %104 : vector<4x128xf32>
    %cst_30 = arith.constant dense<0.000000e+00> : vector<4x128xf32>
    %107 = tpu.matmul %106, %20, %cst_30 {dimension_numbers = #tpu.dot_dimension_numbers<[1], [0], [0], [1], [0, 0, 1, 1], [], []>} : vector<4x128xf32>, vector<128x128xf32>, vector<4x128xf32> -> vector<4x128xf32>
    %cst_31 = arith.constant 3.125000e-02 : f32
    %108 = vector.broadcast %cst_31 : f32 to vector<4x128xf32>
    %109 = arith.mulf %107, %108 : vector<4x128xf32>
    %cst_32 = arith.constant 3.000000e+00 : f32
    %cst_33 = arith.constant 1.000000e-03 : f32
    %110 = arith.mulf %cst_32, %cst_33 : f32
    %111 = vector.broadcast %110 : f32 to vector<4x128xf32>
    %112 = arith.mulf %111, %109 : vector<4x128xf32>
    %113 = vector.extract_strided_slice %81 {offsets = [4, 0], sizes = [4, 128], strides = [1, 1]} : vector<8x128xf32> to vector<4x128xf32>
    %114 = arith.addf %112, %113 : vector<4x128xf32>
    tpu.wait_dma2 semaphore(%arg9 : memref<!tpu.dma_semaphore, #tpu.memory_space<semaphore_mem>>) src(%arg5 : memref<128x256xf32, #tpu.memory_space<any>>) dst(%arg8 : memref<128x256xf32, #tpu.memory_space<vmem>>)
    %c0_34 = arith.constant 0 : index
    %c0_35 = arith.constant 0 : index
    %115 = vector.load %arg1[%c0_34, %c0_35] : memref<8x128xf32, #tpu.memory_space<vmem>>, vector<8x128xf32>
    %c0_36 = arith.constant 0 : index
    %c0_37 = arith.constant 0 : index
    %116 = vector.load %arg8[%c0_36, %c0_37] : memref<128x256xf32, #tpu.memory_space<vmem>>, vector<128x256xf32>
    %cst_38 = arith.constant dense<0.000000e+00> : vector<8x256xf32>
    %117 = tpu.matmul %115, %116, %cst_38 {dimension_numbers = #tpu.dot_dimension_numbers<[1], [0], [0], [1], [0, 0, 1, 1], [], []>} : vector<8x128xf32>, vector<128x256xf32>, vector<8x256xf32> -> vector<8x256xf32>
    %118 = vector.extract_strided_slice %117 {offsets = [0, 0], sizes = [8, 128], strides = [1, 1]} : vector<8x256xf32> to vector<8x128xf32>
    %119 = vector.extract_strided_slice %117 {offsets = [0, 128], sizes = [8, 128], strides = [1, 1]} : vector<8x256xf32> to vector<8x128xf32>
    %cst_39 = arith.constant dense<0.000000e+00> : vector<4x8xf32>
    %120 = tpu.matmul %114, %118, %cst_39 {dimension_numbers = #tpu.dot_dimension_numbers<[1], [1], [0], [0], [0, 0, 1, 0], [], []>} : vector<4x128xf32>, vector<8x128xf32>, vector<4x8xf32> -> vector<4x8xf32>
    %c0_40 = arith.constant 0 : index
    %c0_41 = arith.constant 0 : index
    %121 = vector.load %arg3[%c0_40, %c0_41] : memref<8x128xf32, #tpu.memory_space<vmem>>, vector<8x128xf32>
    %cst_42 = arith.constant 2.000000e+00 : f32
    %122 = vector.broadcast %cst_42 : f32 to vector<8x128xf32>
    %123 = arith.mulf %122, %121 : vector<8x128xf32>
    %c0_43 = arith.constant 0 : index
    %c0_44 = arith.constant 0 : index
    %124 = vector.load %arg4[%c0_43, %c0_44] : memref<8x128xf32, #tpu.memory_space<vmem>>, vector<8x128xf32>
    %125 = arith.addf %123, %124 : vector<8x128xf32>
    %cst_45 = arith.constant 0.333333343 : f32
    %126 = vector.broadcast %cst_45 : f32 to vector<8x128xf32>
    %127 = arith.mulf %125, %126 : vector<8x128xf32>
    %cst_46 = arith.constant 1.000000e+00 : f32
    %128 = vector.broadcast %cst_46 : f32 to vector<1x128xf32>
    %129 = arith.mulf %127, %119 : vector<8x128xf32>
    %cst_47 = arith.constant dense<0.000000e+00> : vector<1x8xf32>
    %130 = tpu.matmul %128, %129, %cst_47 {dimension_numbers = #tpu.dot_dimension_numbers<[1], [1], [0], [0], [0, 0, 1, 0], [], []>} : vector<1x128xf32>, vector<8x128xf32>, vector<1x8xf32> -> vector<1x8xf32>
    %cst_48 = arith.constant 5.000000e-01 : f32
    %131 = vector.broadcast %cst_48 : f32 to vector<1x8xf32>
    %132 = arith.cmpf ogt, %21, %131 : vector<1x8xf32>
    %c0_49 = arith.constant 0 : index
    %c0_50 = arith.constant 0 : index
    %133 = memref.load %arg6[%c0_49, %c0_50] : memref<1x2xf32, #tpu.memory_space<smem>>
    %cst_51 = arith.constant 3.000000e+00 : f32
    %134 = arith.mulf %cst_51, %133 : f32
    %c0_52 = arith.constant 0 : index
    %c1 = arith.constant 1 : index
    %135 = memref.load %arg6[%c0_52, %c1] : memref<1x2xf32, #tpu.memory_space<smem>>
    %cst_53 = arith.constant 0.000000e+00 : f32
    %136 = vector.broadcast %cst_53 : f32 to vector<1x104xf32>
    %c0_54 = arith.constant 0 : index
    %c24 = arith.constant 24 : index
    %137 = vector.load %arg7[%c0_54, %c24] : memref<1x128xf32, #tpu.memory_space<vmem>>, vector<1x104xf32>
    tpu.vector_store %arg7[%c0_54, %c24], %136 {strides = array<i32>} : memref<1x128xf32, #tpu.memory_space<vmem>>, vector<1x104xf32>,
    %138 = vector.extract_strided_slice %120 {offsets = [0, 0], sizes = [1, 8], strides = [1, 1]} : vector<4x8xf32> to vector<1x8xf32>
    %139 = vector.extract_strided_slice %120 {offsets = [1, 0], sizes = [1, 8], strides = [1, 1]} : vector<4x8xf32> to vector<1x8xf32>
    %140 = arith.select %132, %138, %139 : vector<1x8xi1>, vector<1x8xf32>
    %141 = vector.broadcast %134 : f32 to vector<1x8xf32>
    %142 = arith.addf %140, %141 : vector<1x8xf32>
    %c0_55 = arith.constant 0 : index
    %c0_56 = arith.constant 0 : index
    %143 = vector.load %arg7[%c0_55, %c0_56] : memref<1x128xf32, #tpu.memory_space<vmem>>, vector<1x8xf32>
    tpu.vector_store %arg7[%c0_55, %c0_56], %142 {strides = array<i32>} : memref<1x128xf32, #tpu.memory_space<vmem>>, vector<1x8xf32>,
    %144 = vector.extract_strided_slice %120 {offsets = [2, 0], sizes = [1, 8], strides = [1, 1]} : vector<4x8xf32> to vector<1x8xf32>
    %145 = vector.extract_strided_slice %120 {offsets = [3, 0], sizes = [1, 8], strides = [1, 1]} : vector<4x8xf32> to vector<1x8xf32>
    %146 = arith.select %132, %144, %145 : vector<1x8xi1>, vector<1x8xf32>
    %147 = vector.broadcast %134 : f32 to vector<1x8xf32>
    %148 = arith.addf %146, %147 : vector<1x8xf32>
    %c0_57 = arith.constant 0 : index
    %c8 = arith.constant 8 : index
    %149 = vector.load %arg7[%c0_57, %c8] : memref<1x128xf32, #tpu.memory_space<vmem>>, vector<1x8xf32>
    tpu.vector_store %arg7[%c0_57, %c8], %148 {strides = array<i32>} : memref<1x128xf32, #tpu.memory_space<vmem>>, vector<1x8xf32>,
    %150 = vector.broadcast %135 : f32 to vector<1x8xf32>
    %151 = arith.addf %130, %150 : vector<1x8xf32>
    %c0_58 = arith.constant 0 : index
    %c16 = arith.constant 16 : index
    %152 = vector.load %arg7[%c0_58, %c16] : memref<1x128xf32, #tpu.memory_space<vmem>>, vector<1x8xf32>
    tpu.vector_store %arg7[%c0_58, %c16], %151 {strides = array<i32>} : memref<1x128xf32, #tpu.memory_space<vmem>>, vector<1x8xf32>,
    return
  }
}

</mosaic_0001>

<llo_original>
// kernel: tpu_custom_call.1
$region0: #{tpu_custom_call.1}
  #allocation0 [shape = 'u32[]', space=smem, size = 0x4, offset = 0x4, fixed_abs, tag = 'smem constant byte address 0x4 - core index']
  #allocation1 [shape = 'u32[144,128]{1,0:T(1,128)}', space=vmem, size = 0x12000, scoped, tag = 'internal scratch']
  #allocation2 [shape = 'f32[128,256]{1,0:T(8,128)}', space=vmem, size = 0x20000, scoped, tag = 'scratch operand']
  #allocation3 [shape = 's32[1]{0}', space=sflag, size = 0x4, scoped, tag = 'scratch operand']
  #allocation15 [shape = 's32[]', space=sflag, size = 0x4, offset = 0, fixed_abs, tag = 'sflag constant byte address 0x0 - dummy sync flag']
  #allocation16 [shape = 's32[]', space=sflag, size = 0x4, offset = 0, fixed_abs, tag = 'sflag constant byte address 0x0 - dummy sync flag']
  #allocation17 [shape = 'u32[]', space=smem, size = 0x4, offset = 0x44, fixed_abs, tag = 'smem constant byte address 0x44 - assertion arg 0']
  #allocation18 [shape = 'u32[]', space=smem, size = 0x4, offset = 0x48, fixed_abs, tag = 'smem constant byte address 0x48 - assertion arg 1']
  %s0 = inlined_call_operand.hbm [shape: f32[1,8], index: 0, kind: input, shape index: {}]
  %s1 = inlined_call_operand.hbm [shape: f32[8,128], index: 1, kind: input, shape index: {}]
  %s2 = inlined_call_operand.hbm [shape: f32[8,128], index: 2, kind: input, shape index: {}]
  %s3 = inlined_call_operand.vmem [shape: f32[8,128], index: 3, kind: input, shape index: {}]
  %s4 = inlined_call_operand.hbm [shape: f32[8,128], index: 4, kind: input, shape index: {}]
  %s5 = inlined_call_operand.hbm [shape: f32[128,256], index: 5, kind: input, shape index: {}]
  %s6 = inlined_call_operand.vmem [shape: f32[1,2], index: 6, kind: input, shape index: {}]
  %s7 = inlined_call_operand.hbm [shape: f32[1,128], index: 7, kind: output, shape index: {}]
  %s8 = sld [smem:[#allocation0]]
  $region58: #{tpu_custom_call.1} parent=0
    _
  %s10 = ssub.s32 1, %s8
  %s11 = scalar_select 0, %s10, %s8
  $region1: #{tpu_custom_call.1} parent=0
    #allocation4 [shape = 'u8[512]{0}', space=vmem, size = 0x400, scoped, tag = 'input window, operand 0, single buffered']
    #allocation5 [shape = 's32[1]{0}', space=sflag, size = 0x4, scoped, tag = 'scoped memory for tpu_custom_call.1']
    #allocation6 [shape = 's32[1]{0}', space=sflag, size = 0x4, scoped, tag = 'scoped memory for tpu_custom_call.1']
    #allocation7 [shape = 's32[1]{0}', space=sflag, size = 0x4, scoped, tag = 'scoped memory for tpu_custom_call.1']
    #allocation8 [shape = 'u8[4096]{0}', space=vmem, size = 0x1000, scoped, tag = 'input window, operand 1, single buffered']
    #allocation9 [shape = 's32[1]{0}', space=sflag, size = 0x4, scoped, tag = 'scoped memory for tpu_custom_call.1']
    #allocation10 [shape = 'u8[4096]{0}', space=vmem, size = 0x1000, scoped, tag = 'input window, operand 2, single buffered']
    #allocation11 [shape = 'u8[4096]{0}', space=vmem, size = 0x1000, scoped, tag = 'input window, operand 4, single buffered']
    #allocation12 [shape = 's32[1]{0}', space=sflag, size = 0x4, scoped, tag = 'scoped memory for tpu_custom_call.1']
    #allocation13 [shape = 'u8[512]{0}', space=smem, size = 0x200, scoped, tag = 'input window, operand 6, single buffered']
    #allocation14 [shape = 'u8[512]{0}', space=vmem, size = 0x400, scoped, tag = 'output window, operand 0, single buffered']
    %12 = vsyncpa [#allocation5], 0
    %13 = vsyncpa [#allocation9], 0
    %14 = vsyncpa [#allocation12], 0
    %15 = vsyncpa [#allocation7], 0
    %16 = vsyncpa [#allocation6], 0
    // Predicated region
    $region2: #{tpu_custom_call.1} parent=1 // pred_check
      _
    $region3: #{tpu_custom_call.1} parent=1 // pred_check_branch
      %18 = sbr.rel (0) target = $region5
    $region4: #{tpu_custom_call.1} parent=1 // pred_region
      %s20 = ssub.s32 16, 16
      %21 = vsyncadd [#allocation5], %s20
      %s23 = sshll.u32 [#allocation4], 4
      %s24 = int_to_ptr.vmem [resolvable:$true] %s23
      %26 = dma.hbm_to_vmem [thread:$0]  %s0, 16, %s24, [#allocation5]
    $region5: #{tpu_custom_call.1} parent=1 // pred_fallthru
      _
    // Predicated region
    $region6: #{tpu_custom_call.1} parent=1 // pred_check
      _
    $region7: #{tpu_custom_call.1} parent=1 // pred_check_branch
      %28 = sbr.rel (0) target = $region9
    $region8: #{tpu_custom_call.1} parent=1 // pred_region
      %s30 = ssub.s32 128, 128
      %31 = vsyncadd [#allocation9], %s30
      %s33 = sshll.u32 [#allocation8], 4
      %s34 = int_to_ptr.vmem [resolvable:$true] %s33
      %36 = dma.hbm_to_vmem [thread:$0]  %s1, 128, %s34, [#allocation9]
    $region9: #{tpu_custom_call.1} parent=1 // pred_fallthru
      _
    // Predicated region
    $region10: #{tpu_custom_call.1} parent=1 // pred_check
      _
    $region11: #{tpu_custom_call.1} parent=1 // pred_check_branch
      %38 = sbr.rel (0) target = $region13
    $region12: #{tpu_custom_call.1} parent=1 // pred_region
      %s40 = ssub.s32 128, 128
      %41 = vsyncadd [#allocation9], %s40
      %s43 = sshll.u32 [#allocation10], 4
      %s44 = int_to_ptr.vmem [resolvable:$true] %s43
      %46 = dma.hbm_to_vmem [thread:$0]  %s2, 128, %s44, [#allocation9]
    $region13: #{tpu_custom_call.1} parent=1 // pred_fallthru
      _
    // Predicated region
    $region14: #{tpu_custom_call.1} parent=1 // pred_check
      _
    $region15: #{tpu_custom_call.1} parent=1 // pred_check_branch
      %48 = sbr.rel (0) target = $region17
    $region16: #{tpu_custom_call.1} parent=1 // pred_region
      _
    $region17: #{tpu_custom_call.1} parent=1 // pred_fallthru
      _
    // Predicated region
    $region18: #{tpu_custom_call.1} parent=1 // pred_check
      _
    $region19: #{tpu_custom_call.1} parent=1 // pred_check_branch
      %50 = sbr.rel (0) target = $region21
    $region20: #{tpu_custom_call.1} parent=1 // pred_region
      %s52 = ssub.s32 128, 128
      %53 = vsyncadd [#allocation12], %s52
      %s55 = sshll.u32 [#allocation11], 4
      %s56 = int_to_ptr.vmem [resolvable:$true] %s55
      %58 = dma.hbm_to_vmem [thread:$0]  %s4, 128, %s56, [#allocation12]
    $region21: #{tpu_custom_call.1} parent=1 // pred_fallthru
      _
    // Predicated region
    $region22: #{tpu_custom_call.1} parent=1 // pred_check
      _
    $region23: #{tpu_custom_call.1} parent=1 // pred_check_branch
      %60 = sbr.rel (0) target = $region25
    $region24: #{tpu_custom_call.1} parent=1 // pred_region
      %s62 = ssub.s32 16, 16
      %63 = vsyncadd [#allocation7], %s62
      %s65 = sshll.u32 %s6, 4
      %s66 = int_to_ptr.vmem [resolvable:$true] %s65
      %68 = dma.vmem_to_smem %s66, 16, [#allocation13], [#allocation7]
    $region25: #{tpu_custom_call.1} parent=1 // pred_fallthru
      _
    // Predicated region
    $region26: #{tpu_custom_call.1} parent=1 // pred_check
      _
    $region27: #{tpu_custom_call.1} parent=1 // pred_check_branch
      %70 = sbr.rel (0) target = $region29
    $region28: #{tpu_custom_call.1} parent=1 // pred_region
      %71 = dma.done [#allocation5], 16
    $region29: #{tpu_custom_call.1} parent=1 // pred_fallthru
      _
    // Predicated region
    $region30: #{tpu_custom_call.1} parent=1 // pred_check
      _
    $region31: #{tpu_custom_call.1} parent=1 // pred_check_branch
      %73 = sbr.rel (0) target = $region33
    $region32: #{tpu_custom_call.1} parent=1 // pred_region
      %74 = dma.done [#allocation9], 128
    $region33: #{tpu_custom_call.1} parent=1 // pred_fallthru
      _
    // Predicated region
    $region34: #{tpu_custom_call.1} parent=1 // pred_check
      _
    $region35: #{tpu_custom_call.1} parent=1 // pred_check_branch
      %76 = sbr.rel (0) target = $region37
    $region36: #{tpu_custom_call.1} parent=1 // pred_region
      %77 = dma.done [#allocation9], 128
    $region37: #{tpu_custom_call.1} parent=1 // pred_fallthru
      _
    // Predicated region
    $region38: #{tpu_custom_call.1} parent=1 // pred_check
      _
    $region39: #{tpu_custom_call.1} parent=1 // pred_check_branch
      %79 = sbr.rel (0) target = $region41
    $region40: #{tpu_custom_call.1} parent=1 // pred_region
      %80 = dma.done [#allocation12], 128
    $region41: #{tpu_custom_call.1} parent=1 // pred_fallthru
      _
    // Predicated region
    $region42: #{tpu_custom_call.1} parent=1 // pred_check
      _
    $region43: #{tpu_custom_call.1} parent=1 // pred_check_branch
      %82 = sbr.rel (0) target = $region45
    $region44: #{tpu_custom_call.1} parent=1 // pred_region
      %83 = dma.done [#allocation7], 16
    $region45: #{tpu_custom_call.1} parent=1 // pred_fallthru
      _
    %84 = sfence
    // Predicated region
    $region46: #{tpu_custom_call.1} parent=1 // pred_check
      _
    $region47: #{tpu_custom_call.1} parent=1 // pred_check_branch
      %86 = sbr.rel target = $region49
    $region48: #{tpu_custom_call.1} parent=1 // pred_region
      %87 = sst [smem:[#allocation17]] [#allocation16]
      %88 = sst [smem:[#allocation18]] [#allocation15]
    $region49: #{tpu_custom_call.1} parent=1 // pred_fallthru
      _
    %90 = shalt.err (0)
    %s92 = sshll.u32 [#allocation2], 4
    %s93 = int_to_ptr.vmem [resolvable:$true] %s92
    %95 = dma.hbm_to_vmem [thread:$0]  %s5, 4096, %s93, [#allocation3]
    %v96 = vlaneseq
    %v97 = vshrl.u32 %v96, 7
    %v98 = vadd.s32 %v97, 8
    %v99 = vadd.s32 %v97, 16
    %v100 = vadd.s32 %v97, 24
    %v101 = vadd.s32 %v97, 32
    %v102 = vadd.s32 %v97, 40
    %v103 = vadd.s32 %v97, 48
    %v104 = vadd.s32 %v97, 56
    %v105 = vadd.s32 %v97, 64
    %v106 = vadd.s32 %v97, 72
    %v107 = vadd.s32 %v97, 80
    %v108 = vadd.s32 %v97, 88
    %v109 = vadd.s32 %v97, 96
    %v110 = vadd.s32 %v97, 104
    %v111 = vadd.s32 %v97, 112
    %v112 = vadd.s32 %v97, 120
    %v113 = vlaneseq
    %v114 = vand.u32 %v113, 127
    %v115 = vmul.u32 %v97, %v114
    %v116 = vmul.u32 %v98, %v114
    %v117 = vmul.u32 %v99, %v114
    %v118 = vmul.u32 %v100, %v114
    %v119 = vmul.u32 %v101, %v114
    %v120 = vmul.u32 %v102, %v114
    %v121 = vmul.u32 %v103, %v114
    %v122 = vmul.u32 %v104, %v114
    %v123 = vmul.u32 %v105, %v114
    %v124 = vmul.u32 %v106, %v114
    %v125 = vmul.u32 %v107, %v114
    %v126 = vmul.u32 %v108, %v114
    %v127 = vmul.u32 %v109, %v114
    %v128 = vmul.u32 %v110, %v114
    %v129 = vmul.u32 %v111, %v114
    %v130 = vmul.u32 %v112, %v114
    %v131 = vcvt.s32.f32 %v115
    %v132 = vcvt.s32.f32 %v116
    %v133 = vcvt.s32.f32 %v117
    %v134 = vcvt.s32.f32 %v118
    %v135 = vcvt.s32.f32 %v119
    %v136 = vcvt.s32.f32 %v120
    %v137 = vcvt.s32.f32 %v121
    %v138 = vcvt.s32.f32 %v122
    %v139 = vcvt.s32.f32 %v123
    %v140 = vcvt.s32.f32 %v124
    %v141 = vcvt.s32.f32 %v125
    %v142 = vcvt.s32.f32 %v126
    %v143 = vcvt.s32.f32 %v127
    %v144 = vcvt.s32.f32 %v128
    %v145 = vcvt.s32.f32 %v129
    %v146 = vcvt.s32.f32 %v130
    %v147 = vmul.f32 %v131, 0.03125
    %v148 = vmul.f32 %v132, 0.03125
    %v149 = vmul.f32 %v133, 0.03125
    %v150 = vmul.f32 %v134, 0.03125
    %v151 = vmul.f32 %v135, 0.03125
    %v152 = vmul.f32 %v136, 0.03125
    %v153 = vmul.f32 %v137, 0.03125
    %v154 = vmul.f32 %v138, 0.03125
    %v155 = vmul.f32 %v139, 0.03125
    %v156 = vmul.f32 %v140, 0.03125
    %v157 = vmul.f32 %v141, 0.03125
    %v158 = vmul.f32 %v142, 0.03125
    %v159 = vmul.f32 %v143, 0.03125
    %v160 = vmul.f32 %v144, 0.03125
    %v161 = vmul.f32 %v145, 0.03125
    %v162 = vmul.f32 %v146, 0.03125
    %v163 = vfloor.f32 %v147
    %v164 = vfloor.f32 %v148
    %v165 = vfloor.f32 %v149
    %v166 = vfloor.f32 %v150
    %v167 = vfloor.f32 %v151
    %v168 = vfloor.f32 %v152
    %v169 = vfloor.f32 %v153
    %v170 = vfloor.f32 %v154
    %v171 = vfloor.f32 %v155
    %v172 = vfloor.f32 %v156
    %v173 = vfloor.f32 %v157
    %v174 = vfloor.f32 %v158
    %v175 = vfloor.f32 %v159
    %v176 = vfloor.f32 %v160
    %v177 = vfloor.f32 %v161
    %v178 = vfloor.f32 %v162
    %v179 = vmul.f32 %v163, 32.0
    %v180 = vmul.f32 %v164, 32.0
    %v181 = vmul.f32 %v165, 32.0
    %v182 = vmul.f32 %v166, 32.0
    %v183 = vmul.f32 %v167, 32.0
    %v184 = vmul.f32 %v168, 32.0
    %v185 = vmul.f32 %v169, 32.0
    %v186 = vmul.f32 %v170, 32.0
    %v187 = vmul.f32 %v171, 32.0
    %v188 = vmul.f32 %v172, 32.0
    %v189 = vmul.f32 %v173, 32.0
    %v190 = vmul.f32 %v174, 32.0
    %v191 = vmul.f32 %v175, 32.0
    %v192 = vmul.f32 %v176, 32.0
    %v193 = vmul.f32 %v177, 32.0
    %v194 = vmul.f32 %v178, 32.0
    %v195 = vsub.f32 %v131, %v179
    %v196 = vsub.f32 %v132, %v180
    %v197 = vsub.f32 %v133, %v181
    %v198 = vsub.f32 %v134, %v182
    %v199 = vsub.f32 %v135, %v183
    %v200 = vsub.f32 %v136, %v184
    %v201 = vsub.f32 %v137, %v185
    %v202 = vsub.f32 %v138, %v186
    %v203 = vsub.f32 %v139, %v187
    %v204 = vsub.f32 %v140, %v188
    %v205 = vsub.f32 %v141, %v189
    %v206 = vsub.f32 %v142, %v190
    %v207 = vsub.f32 %v143, %v191
    %v208 = vsub.f32 %v144, %v192
    %v209 = vsub.f32 %v145, %v193
    %v210 = vsub.f32 %v146, %v194
    %v211 = vmul.f32 %v195, 0.19634955
    %v212 = vmul.f32 %v196, 0.19634955
    %v213 = vmul.f32 %v197, 0.19634955
    %v214 = vmul.f32 %v198, 0.19634955
    %v215 = vmul.f32 %v199, 0.19634955
    %v216 = vmul.f32 %v200, 0.19634955
    %v217 = vmul.f32 %v201, 0.19634955
    %v218 = vmul.f32 %v202, 0.19634955
    %v219 = vmul.f32 %v203, 0.19634955
    %v220 = vmul.f32 %v204, 0.19634955
    %v221 = vmul.f32 %v205, 0.19634955
    %v222 = vmul.f32 %v206, 0.19634955
    %v223 = vmul.f32 %v207, 0.19634955
    %v224 = vmul.f32 %v208, 0.19634955
    %v225 = vmul.f32 %v209, 0.19634955
    %v226 = vmul.f32 %v210, 0.19634955
    %v227 = vand.u32 2147483647, %v211
    %vm228 = vcmp.le.f32.partialorder %v227, 0.7853982
    %vm229 = vcmp.lt.s32.totalorder %v211, 0
    %v230 = vand.u32 %v211, 2139095040
    %v231 = vshrl.u32 %v230, 23
    %v232 = vsub.s32 %v231, 127
    %v233 = vand.u32 2147483647, %v211
    %v234 = vand.u32 %v233, 8388607
    %v235 = vor.u32 %v234, 8388608
    %v236 = vsub.s32 0, %v235
    %v237 = vadd.s32 %v232, 1
    %vm238 = vcmp.gt.s32.totalorder %v237, 0
    %v239 = vsel %vm238, %v237, 0
    %v240 = vshrl.u32 %v239, 5
    %v241 = vand.u32 %v239, 31
    %v242 = vsub.s32 32, %v241
    %v243 = vshrl.u32 683565275, %v242
    %v244 = vshll.u32 683565275, %v241
    %v245 = vshrl.u32 2475754826, %v242
    %v246 = vor.u32 %v244, %v245
    %v247 = vshll.u32 2475754826, %v241
    %v248 = vshrl.u32 2131351028, %v242
    %v249 = vor.u32 %v247, %v248
    %v250 = vshll.u32 2131351028, %v241
    %v251 = vshrl.u32 2102212464, %v242
    %v252 = vor.u32 %v250, %v251
    %v253 = vshll.u32 2102212464, %v241
    %v254 = vshrl.u32 920167782, %v242
    %v255 = vor.u32 %v253, %v254
    %v256 = vshll.u32 920167782, %v241
    %v257 = vshrl.u32 1326507024, %v242
    %v258 = vor.u32 %v256, %v257
    %vm259 = vcmp.lt.s32.totalorder %v240, 1
    %vm260 = vcmp.lt.s32.totalorder %v240, 2
    %vm261 = vcmp.lt.s32.totalorder %v240, 3
    %vm262 = vcmp.lt.s32.totalorder %v240, 4
    %v263 = vsel %vm259, %v243, %v246
    %v264 = vsel %vm262, %v252, 2102212464
    %v265 = vsel %vm261, %v249, %v264
    %v266 = vsel %vm260, %v263, %v265
    %v267 = vsel %vm259, %v246, %v249
    %v268 = vsel %vm262, %v255, 920167782
    %v269 = vsel %vm261, %v252, %v268
    %v270 = vsel %vm260, %v267, %v269
    %v271 = vsel %vm259, %v249, %v252
    %v272 = vsel %vm262, %v258, 1326507024
    %v273 = vsel %vm261, %v255, %v272
    %v274 = vsel %vm260, %v271, %v273
    %v275 = vshll.u32 %v235, 8
    %v276 = vmul.u32.u64.compose %v275, %v274
    %v277 = vextract.low.u32 %v276
    %v278 = vextract.high.u32 %v276
    %v279 = vmul.u32.u64.compose %v275, %v270
    %v280 = vextract.low.u32 %v279
    %v281 = vextract.high.u32 %v279
    %v282 = vmul.u32 %v275, %v266
    %v283 = vadd.s32 %v278, %v280
    %vm284 = vc.u32 %v278, %v280
    %v285 = vadd.s32 %v281, 1
    %v286 = vsel %vm284, %v285, %v281
    %v287 = vadd.s32 %v282, %v286
    %v288 = vadd.s32 %v287, 536870912
    %v289 = vshrl.u32 %v288, 30
    %v290 = vshll.u32 %v289, 30
    %v291 = vsub.s32 %v287, %v290
    %vm292 = vcmp.lt.s32.totalorder %v291, 0
    %v293 = vsub.s32 0, %v291
    %v294 = vsel %vm292, %v293, %v291
    %v295 = vclz %v294
    %v296 = vsub.s32 %v295, 2
    %vm297 = vcmp.gt.s32.totalorder 0, %v296
    %v298 = vsel %vm297, 0, %v296
    %v299 = vsub.s32 32, %v298
    %v300 = vshll.u32 %v291, %v298
    %v301 = vshrl.u32 %v283, %v299
    %v302 = vor.u32 %v300, %v301
    %v303 = vsub.s32 4294967266, %v298
    %v304 = vadd.s32 %v303, 127
    %v305 = vshll.u32 %v304, 23
    %v306 = vor.u32 4788187, %v305
    %v307 = vand.u32 2147483647, %v306
    %v309 = vcvt.s32.f32 %v302
    %v310 = vmul.f32 %v309, %v307
    %v311 = vxor.u32 %v310, 2147483648
    %v312 = vsel %vm229, %v311, %v310
    %v313 = vsub.s32 4, %v289
    %v314 = vsel %vm229, %v313, %v289
    %v315 = vsel %vm228, %v211, %v312
    %v316 = vsel %vm228, 0, %v314
    %v317 = vcosq.f32.pop %v315
    %v318 = vsinq.f32.pop %v315
    %vm319 = vweird.f32 %v211
    %v320 = vand.u32 %v316, 3
    %vm321 = vcmp.lt.s32.totalorder %v320, 2
    %vm322 = vcmp.eq.s32.totalorder %v320, 0
    %v323 = vxor.u32 %v318, 2147483648
    %v324 = vsel %vm322, %v317, %v323
    %vm325 = vcmp.eq.s32.totalorder %v320, 2
    %v326 = vxor.u32 %v317, 2147483648
    %v327 = vsel %vm325, %v326, %v318
    %v328 = vsel %vm321, %v324, %v327
    %v329 = vsel %vm319, nan, %v328
    %v330 = vand.u32 2147483647, %v212
    %vm331 = vcmp.le.f32.partialorder %v330, 0.7853982
    %vm332 = vcmp.lt.s32.totalorder %v212, 0
    %v333 = vand.u32 %v212, 2139095040
    %v334 = vshrl.u32 %v333, 23
    %v335 = vsub.s32 %v334, 127
    %v336 = vand.u32 2147483647, %v212
    %v337 = vand.u32 %v336, 8388607
    %v338 = vor.u32 %v337, 8388608
    %v339 = vsub.s32 0, %v338
    %v340 = vadd.s32 %v335, 1
    %vm341 = vcmp.gt.s32.totalorder %v340, 0
    %v342 = vsel %vm341, %v340, 0
    %v343 = vshrl.u32 %v342, 5
    %v344 = vand.u32 %v342, 31
    %v345 = vsub.s32 32, %v344
    %v346 = vshrl.u32 683565275, %v345
    %v347 = vshll.u32 683565275, %v344
    %v348 = vshrl.u32 2475754826, %v345
    %v349 = vor.u32 %v347, %v348
    %v350 = vshll.u32 2475754826, %v344
    %v351 = vshrl.u32 2131351028, %v345
    %v352 = vor.u32 %v350, %v351
    %v353 = vshll.u32 2131351028, %v344
    %v354 = vshrl.u32 2102212464, %v345
    %v355 = vor.u32 %v353, %v354
    %v356 = vshll.u32 2102212464, %v344
    %v357 = vshrl.u32 920167782, %v345
    %v358 = vor.u32 %v356, %v357
    %v359 = vshll.u32 920167782, %v344
    %v360 = vshrl.u32 1326507024, %v345
    %v361 = vor.u32 %v359, %v360
    %vm362 = vcmp.lt.s32.totalorder %v343, 1
    %vm363 = vcmp.lt.s32.totalorder %v343, 2
    %vm364 = vcmp.lt.s32.totalorder %v343, 3
    %vm365 = vcmp.lt.s32.totalorder %v343, 4
    %v366 = vsel %vm362, %v346, %v349
    %v367 = vsel %vm365, %v355, 2102212464
    %v368 = vsel %vm364, %v352, %v367
    %v369 = vsel %vm363, %v366, %v368
    %v370 = vsel %vm362, %v349, %v352
    %v371 = vsel %vm365, %v358, 920167782
    %v372 = vsel %vm364, %v355, %v371
    %v373 = vsel %vm363, %v370, %v372
    %v374 = vsel %vm362, %v352, %v355
    %v375 = vsel %vm365, %v361, 1326507024
    %v376 = vsel %vm364, %v358, %v375
    %v377 = vsel %vm363, %v374, %v376
    %v378 = vshll.u32 %v338, 8
    %v379 = vmul.u32.u64.compose %v378, %v377
    %v380 = vextract.low.u32 %v379
    %v381 = vextract.high.u32 %v379
    %v382 = vmul.u32.u64.compose %v378, %v373
    %v383 = vextract.low.u32 %v382
    %v384 = vextract.high.u32 %v382
    %v385 = vmul.u32 %v378, %v369
    %v386 = vadd.s32 %v381, %v383
    %vm387 = vc.u32 %v381, %v383
    %v388 = vadd.s32 %v384, 1
    %v389 = vsel %vm387, %v388, %v384
    %v390 = vadd.s32 %v385, %v389
    %v391 = vadd.s32 %v390, 536870912
    %v392 = vshrl.u32 %v391, 30
    %v393 = vshll.u32 %v392, 30
    %v394 = vsub.s32 %v390, %v393
    %vm395 = vcmp.lt.s32.totalorder %v394, 0
    %v396 = vsub.s32 0, %v394
    %v397 = vsel %vm395, %v396, %v394
    %v398 = vclz %v397
    %v399 = vsub.s32 %v398, 2
    %vm400 = vcmp.gt.s32.totalorder 0, %v399
    %v401 = vsel %vm400, 0, %v399
    %v402 = vsub.s32 32, %v401
    %v403 = vshll.u32 %v394, %v401
    %v404 = vshrl.u32 %v386, %v402
    %v405 = vor.u32 %v403, %v404
    %v406 = vsub.s32 4294967266, %v401
    %v407 = vadd.s32 %v406, 127
    %v408 = vshll.u32 %v407, 23
    %v409 = vor.u32 4788187, %v408
    %v410 = vand.u32 2147483647, %v409
    %v412 = vcvt.s32.f32 %v405
    %v413 = vmul.f32 %v412, %v410
    %v414 = vxor.u32 %v413, 2147483648
    %v415 = vsel %vm332, %v414, %v413
    %v416 = vsub.s32 4, %v392
    %v417 = vsel %vm332, %v416, %v392
    %v418 = vsel %vm331, %v212, %v415
    %v419 = vsel %vm331, 0, %v417
    %v420 = vcosq.f32.pop %v418
    %v421 = vsinq.f32.pop %v418
    %vm422 = vweird.f32 %v212
    %v423 = vand.u32 %v419, 3
    %vm424 = vcmp.lt.s32.totalorder %v423, 2
    %vm425 = vcmp.eq.s32.totalorder %v423, 0
    %v426 = vxor.u32 %v421, 2147483648
    %v427 = vsel %vm425, %v420, %v426
    %vm428 = vcmp.eq.s32.totalorder %v423, 2
    %v429 = vxor.u32 %v420, 2147483648
    %v430 = vsel %vm428, %v429, %v421
    %v431 = vsel %vm424, %v427, %v430
    %v432 = vsel %vm422, nan, %v431
    %v433 = vand.u32 2147483647, %v213
    %vm434 = vcmp.le.f32.partialorder %v433, 0.7853982
    %vm435 = vcmp.lt.s32.totalorder %v213, 0
    %v436 = vand.u32 %v213, 2139095040
    %v437 = vshrl.u32 %v436, 23
    %v438 = vsub.s32 %v437, 127
    %v439 = vand.u32 2147483647, %v213
    %v440 = vand.u32 %v439, 8388607
    %v441 = vor.u32 %v440, 8388608
    %v442 = vsub.s32 0, %v441
    %v443 = vadd.s32 %v438, 1
    %vm444 = vcmp.gt.s32.totalorder %v443, 0
    %v445 = vsel %vm444, %v443, 0
    %v446 = vshrl.u32 %v445, 5
    %v447 = vand.u32 %v445, 31
    %v448 = vsub.s32 32, %v447
    %v449 = vshrl.u32 683565275, %v448
    %v450 = vshll.u32 683565275, %v447
    %v451 = vshrl.u32 2475754826, %v448
    %v452 = vor.u32 %v450, %v451
    %v453 = vshll.u32 2475754826, %v447
    %v454 = vshrl.u32 2131351028, %v448
    %v455 = vor.u32 %v453, %v454
    %v456 = vshll.u32 2131351028, %v447
    %v457 = vshrl.u32 2102212464, %v448
    %v458 = vor.u32 %v456, %v457
    %v459 = vshll.u32 2102212464, %v447
    %v460 = vshrl.u32 920167782, %v448
    %v461 = vor.u32 %v459, %v460
    %v462 = vshll.u32 920167782, %v447
    %v463 = vshrl.u32 1326507024, %v448
    %v464 = vor.u32 %v462, %v463
    %vm465 = vcmp.lt.s32.totalorder %v446, 1
    %vm466 = vcmp.lt.s32.totalorder %v446, 2
    %vm467 = vcmp.lt.s32.totalorder %v446, 3
    %vm468 = vcmp.lt.s32.totalorder %v446, 4
    %v469 = vsel %vm465, %v449, %v452
    %v470 = vsel %vm468, %v458, 2102212464
    %v471 = vsel %vm467, %v455, %v470
    %v472 = vsel %vm466, %v469, %v471
    %v473 = vsel %vm465, %v452, %v455
    %v474 = vsel %vm468, %v461, 920167782
    %v475 = vsel %vm467, %v458, %v474
    %v476 = vsel %vm466, %v473, %v475
    %v477 = vsel %vm465, %v455, %v458
    %v478 = vsel %vm468, %v464, 1326507024
    %v479 = vsel %vm467, %v461, %v478
    %v480 = vsel %vm466, %v477, %v479
    %v481 = vshll.u32 %v441, 8
    %v482 = vmul.u32.u64.compose %v481, %v480
    %v483 = vextract.low.u32 %v482
    %v484 = vextract.high.u32 %v482
    %v485 = vmul.u32.u64.compose %v481, %v476
    %v486 = vextract.low.u32 %v485
    %v487 = vextract.high.u32 %v485
    %v488 = vmul.u32 %v481, %v472
    %v489 = vadd.s32 %v484, %v486
    %vm490 = vc.u32 %v484, %v486
    %v491 = vadd.s32 %v487, 1
    %v492 = vsel %vm490, %v491, %v487
    %v493 = vadd.s32 %v488, %v492
    %v494 = vadd.s32 %v493, 536870912
    %v495 = vshrl.u32 %v494, 30
    %v496 = vshll.u32 %v495, 30
    %v497 = vsub.s32 %v493, %v496
    %vm498 = vcmp.lt.s32.totalorder %v497, 0
    %v499 = vsub.s32 0, %v497
    %v500 = vsel %vm498, %v499, %v497
    %v501 = vclz %v500
    %v502 = vsub.s32 %v501, 2
    %vm503 = vcmp.gt.s32.totalorder 0, %v502
    %v504 = vsel %vm503, 0, %v502
    %v505 = vsub.s32 32, %v504
    %v506 = vshll.u32 %v497, %v504
    %v507 = vshrl.u32 %v489, %v505
    %v508 = vor.u32 %v506, %v507
    %v509 = vsub.s32 4294967266, %v504
    %v510 = vadd.s32 %v509, 127
    %v511 = vshll.u32 %v510, 23
    %v512 = vor.u32 4788187, %v511
    %v513 = vand.u32 2147483647, %v512
    %v515 = vcvt.s32.f32 %v508
    %v516 = vmul.f32 %v515, %v513
    %v517 = vxor.u32 %v516, 2147483648
    %v518 = vsel %vm435, %v517, %v516
    %v519 = vsub.s32 4, %v495
    %v520 = vsel %vm435, %v519, %v495
    %v521 = vsel %vm434, %v213, %v518
    %v522 = vsel %vm434, 0, %v520
    %v523 = vcosq.f32.pop %v521
    %v524 = vsinq.f32.pop %v521
    %vm525 = vweird.f32 %v213
    %v526 = vand.u32 %v522, 3
    %vm527 = vcmp.lt.s32.totalorder %v526, 2
    %vm528 = vcmp.eq.s32.totalorder %v526, 0
    %v529 = vxor.u32 %v524, 2147483648
    %v530 = vsel %vm528, %v523, %v529
    %vm531 = vcmp.eq.s32.totalorder %v526, 2
    %v532 = vxor.u32 %v523, 2147483648
    %v533 = vsel %vm531, %v532, %v524
    %v534 = vsel %vm527, %v530, %v533
    %v535 = vsel %vm525, nan, %v534
    %v536 = vand.u32 2147483647, %v214
    %vm537 = vcmp.le.f32.partialorder %v536, 0.7853982
    %vm538 = vcmp.lt.s32.totalorder %v214, 0
    %v539 = vand.u32 %v214, 2139095040
    %v540 = vshrl.u32 %v539, 23
    %v541 = vsub.s32 %v540, 127
    %v542 = vand.u32 2147483647, %v214
    %v543 = vand.u32 %v542, 8388607
    %v544 = vor.u32 %v543, 8388608
    %v545 = vsub.s32 0, %v544
    %v546 = vadd.s32 %v541, 1
    %vm547 = vcmp.gt.s32.totalorder %v546, 0
    %v548 = vsel %vm547, %v546, 0
    %v549 = vshrl.u32 %v548, 5
    %v550 = vand.u32 %v548, 31
    %v551 = vsub.s32 32, %v550
    %v552 = vshrl.u32 683565275, %v551
    %v553 = vshll.u32 683565275, %v550
    %v554 = vshrl.u32 2475754826, %v551
    %v555 = vor.u32 %v553, %v554
    %v556 = vshll.u32 2475754826, %v550
    %v557 = vshrl.u32 2131351028, %v551
    %v558 = vor.u32 %v556, %v557
    %v559 = vshll.u32 2131351028, %v550
    %v560 = vshrl.u32 2102212464, %v551
    %v561 = vor.u32 %v559, %v560
    %v562 = vshll.u32 2102212464, %v550
    %v563 = vshrl.u32 920167782, %v551
    %v564 = vor.u32 %v562, %v563
    %v565 = vshll.u32 920167782, %v550
    %v566 = vshrl.u32 1326507024, %v551
    %v567 = vor.u32 %v565, %v566
    %vm568 = vcmp.lt.s32.totalorder %v549, 1
    %vm569 = vcmp.lt.s32.totalorder %v549, 2
    %vm570 = vcmp.lt.s32.totalorder %v549, 3
    %vm571 = vcmp.lt.s32.totalorder %v549, 4
    %v572 = vsel %vm568, %v552, %v555
    %v573 = vsel %vm571, %v561, 2102212464
    %v574 = vsel %vm570, %v558, %v573
    %v575 = vsel %vm569, %v572, %v574
    %v576 = vsel %vm568, %v555, %v558
    %v577 = vsel %vm571, %v564, 920167782
    %v578 = vsel %vm570, %v561, %v577
    %v579 = vsel %vm569, %v576, %v578
    %v580 = vsel %vm568, %v558, %v561
    %v581 = vsel %vm571, %v567, 1326507024
    %v582 = vsel %vm570, %v564, %v581
    %v583 = vsel %vm569, %v580, %v582
    %v584 = vshll.u32 %v544, 8
    %v585 = vmul.u32.u64.compose %v584, %v583
    %v586 = vextract.low.u32 %v585
    %v587 = vextract.high.u32 %v585
    %v588 = vmul.u32.u64.compose %v584, %v579
    %v589 = vextract.low.u32 %v588
    %v590 = vextract.high.u32 %v588
    %v591 = vmul.u32 %v584, %v575
    %v592 = vadd.s32 %v587, %v589
    %vm593 = vc.u32 %v587, %v589
    %v594 = vadd.s32 %v590, 1
    %v595 = vsel %vm593, %v594, %v590
    %v596 = vadd.s32 %v591, %v595
    %v597 = vadd.s32 %v596, 536870912
    %v598 = vshrl.u32 %v597, 30
    %v599 = vshll.u32 %v598, 30
    %v600 = vsub.s32 %v596, %v599
    %vm601 = vcmp.lt.s32.totalorder %v600, 0
    %v602 = vsub.s32 0, %v600
    %v603 = vsel %vm601, %v602, %v600
    %v604 = vclz %v603
    %v605 = vsub.s32 %v604, 2
    %vm606 = vcmp.gt.s32.totalorder 0, %v605
    %v607 = vsel %vm606, 0, %v605
    %v608 = vsub.s32 32, %v607
    %v609 = vshll.u32 %v600, %v607
    %v610 = vshrl.u32 %v592, %v608
    %v611 = vor.u32 %v609, %v610
    %v612 = vsub.s32 4294967266, %v607
    %v613 = vadd.s32 %v612, 127
    %v614 = vshll.u32 %v613, 23
    %v615 = vor.u32 4788187, %v614
    %v616 = vand.u32 2147483647, %v615
    %v618 = vcvt.s32.f32 %v611
    %v619 = vmul.f32 %v618, %v616
    %v620 = vxor.u32 %v619, 2147483648
    %v621 = vsel %vm538, %v620, %v619
    %v622 = vsub.s32 4, %v598
    %v623 = vsel %vm538, %v622, %v598
    %v624 = vsel %vm537, %v214, %v621
    %v625 = vsel %vm537, 0, %v623
    %v626 = vcosq.f32.pop %v624
    %v627 = vsinq.f32.pop %v624
    %vm628 = vweird.f32 %v214
    %v629 = vand.u32 %v625, 3
    %vm630 = vcmp.lt.s32.totalorder %v629, 2
    %vm631 = vcmp.eq.s32.totalorder %v629, 0
    %v632 = vxor.u32 %v627, 2147483648
    %v633 = vsel %vm631, %v626, %v632
    %vm634 = vcmp.eq.s32.totalorder %v629, 2
    %v635 = vxor.u32 %v626, 2147483648
    %v636 = vsel %vm634, %v635, %v627
    %v637 = vsel %vm630, %v633, %v636
    %v638 = vsel %vm628, nan, %v637
    %v639 = vand.u32 2147483647, %v215
    %vm640 = vcmp.le.f32.partialorder %v639, 0.7853982
    %vm641 = vcmp.lt.s32.totalorder %v215, 0
    %v642 = vand.u32 %v215, 2139095040
    %v643 = vshrl.u32 %v642, 23
    %v644 = vsub.s32 %v643, 127
    %v645 = vand.u32 2147483647, %v215
    %v646 = vand.u32 %v645, 8388607
    %v647 = vor.u32 %v646, 8388608
    %v648 = vsub.s32 0, %v647
    %v649 = vadd.s32 %v644, 1
    %vm650 = vcmp.gt.s32.totalorder %v649, 0
    %v651 = vsel %vm650, %v649, 0
    %v652 = vshrl.u32 %v651, 5
    %v653 = vand.u32 %v651, 31
    %v654 = vsub.s32 32, %v653
    %v655 = vshrl.u32 683565275, %v654
    %v656 = vshll.u32 683565275, %v653
    %v657 = vshrl.u32 2475754826, %v654
    %v658 = vor.u32 %v656, %v657
    %v659 = vshll.u32 2475754826, %v653
    %v660 = vshrl.u32 2131351028, %v654
    %v661 = vor.u32 %v659, %v660
    %v662 = vshll.u32 2131351028, %v653
    %v663 = vshrl.u32 2102212464, %v654
    %v664 = vor.u32 %v662, %v663
    %v665 = vshll.u32 2102212464, %v653
    %v666 = vshrl.u32 920167782, %v654
    %v667 = vor.u32 %v665, %v666
    %v668 = vshll.u32 920167782, %v653
    %v669 = vshrl.u32 1326507024, %v654
    %v670 = vor.u32 %v668, %v669
    %vm671 = vcmp.lt.s32.totalorder %v652, 1
    %vm672 = vcmp.lt.s32.totalorder %v652, 2
    %vm673 = vcmp.lt.s32.totalorder %v652, 3
    %vm674 = vcmp.lt.s32.totalorder %v652, 4
    %v675 = vsel %vm671, %v655, %v658
    %v676 = vsel %vm674, %v664, 2102212464
    %v677 = vsel %vm673, %v661, %v676
    %v678 = vsel %vm672, %v675, %v677
    %v679 = vsel %vm671, %v658, %v661
    %v680 = vsel %vm674, %v667, 920167782
    %v681 = vsel %vm673, %v664, %v680
    %v682 = vsel %vm672, %v679, %v681
    %v683 = vsel %vm671, %v661, %v664
    %v684 = vsel %vm674, %v670, 1326507024
    %v685 = vsel %vm673, %v667, %v684
    %v686 = vsel %vm672, %v683, %v685
    %v687 = vshll.u32 %v647, 8
    %v688 = vmul.u32.u64.compose %v687, %v686
    %v689 = vextract.low.u32 %v688
    %v690 = vextract.high.u32 %v688
    %v691 = vmul.u32.u64.compose %v687, %v682
    %v692 = vextract.low.u32 %v691
    %v693 = vextract.high.u32 %v691
    %v694 = vmul.u32 %v687, %v678
    %v695 = vadd.s32 %v690, %v692
    %vm696 = vc.u32 %v690, %v692
    %v697 = vadd.s32 %v693, 1
    %v698 = vsel %vm696, %v697, %v693
    %v699 = vadd.s32 %v694, %v698
    %v700 = vadd.s32 %v699, 536870912
    %v701 = vshrl.u32 %v700, 30
    %v702 = vshll.u32 %v701, 30
    %v703 = vsub.s32 %v699, %v702
    %vm704 = vcmp.lt.s32.totalorder %v703, 0
    %v705 = vsub.s32 0, %v703
    %v706 = vsel %vm704, %v705, %v703
    %v707 = vclz %v706
    %v708 = vsub.s32 %v707, 2
    %vm709 = vcmp.gt.s32.totalorder 0, %v708
    %v710 = vsel %vm709, 0, %v708
    %v711 = vsub.s32 32, %v710
    %v712 = vshll.u32 %v703, %v710
    %v713 = vshrl.u32 %v695, %v711
    %v714 = vor.u32 %v712, %v713
    %v715 = vsub.s32 4294967266, %v710
    %v716 = vadd.s32 %v715, 127
    %v717 = vshll.u32 %v716, 23
    %v718 = vor.u32 4788187, %v717
    %v719 = vand.u32 2147483647, %v718
    %v721 = vcvt.s32.f32 %v714
    %v722 = vmul.f32 %v721, %v719
    %v723 = vxor.u32 %v722, 2147483648
    %v724 = vsel %vm641, %v723, %v722
    %v725 = vsub.s32 4, %v701
    %v726 = vsel %vm641, %v725, %v701
    %v727 = vsel %vm640, %v215, %v724
    %v728 = vsel %vm640, 0, %v726
    %v729 = vcosq.f32.pop %v727
    %v730 = vsinq.f32.pop %v727
    %vm731 = vweird.f32 %v215
    %v732 = vand.u32 %v728, 3
    %vm733 = vcmp.lt.s32.totalorder %v732, 2
    %vm734 = vcmp.eq.s32.totalorder %v732, 0
    %v735 = vxor.u32 %v730, 2147483648
    %v736 = vsel %vm734, %v729, %v735
    %vm737 = vcmp.eq.s32.totalorder %v732, 2
    %v738 = vxor.u32 %v729, 2147483648
    %v739 = vsel %vm737, %v738, %v730
    %v740 = vsel %vm733, %v736, %v739
    %v741 = vsel %vm731, nan, %v740
    %v742 = vand.u32 2147483647, %v216
    %vm743 = vcmp.le.f32.partialorder %v742, 0.7853982
    %vm744 = vcmp.lt.s32.totalorder %v216, 0
    %v745 = vand.u32 %v216, 2139095040
    %v746 = vshrl.u32 %v745, 23
    %v747 = vsub.s32 %v746, 127
    %v748 = vand.u32 2147483647, %v216
    %v749 = vand.u32 %v748, 8388607
    %v750 = vor.u32 %v749, 8388608
    %v751 = vsub.s32 0, %v750
    %v752 = vadd.s32 %v747, 1
    %vm753 = vcmp.gt.s32.totalorder %v752, 0
    %v754 = vsel %vm753, %v752, 0
    %v755 = vshrl.u32 %v754, 5
    %v756 = vand.u32 %v754, 31
    %v757 = vsub.s32 32, %v756
    %v758 = vshrl.u32 683565275, %v757
    %v759 = vshll.u32 683565275, %v756
    %v760 = vshrl.u32 2475754826, %v757
    %v761 = vor.u32 %v759, %v760
    %v762 = vshll.u32 2475754826, %v756
    %v763 = vshrl.u32 2131351028, %v757
    %v764 = vor.u32 %v762, %v763
    %v765 = vshll.u32 2131351028, %v756
    %v766 = vshrl.u32 2102212464, %v757
    %v767 = vor.u32 %v765, %v766
    %v768 = vshll.u32 2102212464, %v756
    %v769 = vshrl.u32 920167782, %v757
    %v770 = vor.u32 %v768, %v769
    %v771 = vshll.u32 920167782, %v756
    %v772 = vshrl.u32 1326507024, %v757
    %v773 = vor.u32 %v771, %v772
    %vm774 = vcmp.lt.s32.totalorder %v755, 1
    %vm775 = vcmp.lt.s32.totalorder %v755, 2
    %vm776 = vcmp.lt.s32.totalorder %v755, 3
    %vm777 = vcmp.lt.s32.totalorder %v755, 4
    %v778 = vsel %vm774, %v758, %v761
    %v779 = vsel %vm777, %v767, 2102212464
    %v780 = vsel %vm776, %v764, %v779
    %v781 = vsel %vm775, %v778, %v780
    %v782 = vsel %vm774, %v761, %v764
    %v783 = vsel %vm777, %v770, 920167782
    %v784 = vsel %vm776, %v767, %v783
    %v785 = vsel %vm775, %v782, %v784
    %v786 = vsel %vm774, %v764, %v767
    %v787 = vsel %vm777, %v773, 1326507024
    %v788 = vsel %vm776, %v770, %v787
    %v789 = vsel %vm775, %v786, %v788
    %v790 = vshll.u32 %v750, 8
    %v791 = vmul.u32.u64.compose %v790, %v789
    %v792 = vextract.low.u32 %v791
    %v793 = vextract.high.u32 %v791
    %v794 = vmul.u32.u64.compose %v790, %v785
    %v795 = vextract.low.u32 %v794
    %v796 = vextract.high.u32 %v794
    %v797 = vmul.u32 %v790, %v781
    %v798 = vadd.s32 %v793, %v795
    %vm799 = vc.u32 %v793, %v795
    %v800 = vadd.s32 %v796, 1
    %v801 = vsel %vm799, %v800, %v796
    %v802 = vadd.s32 %v797, %v801
    %v803 = vadd.s32 %v802, 536870912
    %v804 = vshrl.u32 %v803, 30
    %v805 = vshll.u32 %v804, 30
    %v806 = vsub.s32 %v802, %v805
    %vm807 = vcmp.lt.s32.totalorder %v806, 0
    %v808 = vsub.s32 0, %v806
    %v809 = vsel %vm807, %v808, %v806
    %v810 = vclz %v809
    %v811 = vsub.s32 %v810, 2
    %vm812 = vcmp.gt.s32.totalorder 0, %v811
    %v813 = vsel %vm812, 0, %v811
    %v814 = vsub.s32 32, %v813
    %v815 = vshll.u32 %v806, %v813
    %v816 = vshrl.u32 %v798, %v814
    %v817 = vor.u32 %v815, %v816
    %v818 = vsub.s32 4294967266, %v813
    %v819 = vadd.s32 %v818, 127
    %v820 = vshll.u32 %v819, 23
    %v821 = vor.u32 4788187, %v820
    %v822 = vand.u32 2147483647, %v821
    %v824 = vcvt.s32.f32 %v817
    %v825 = vmul.f32 %v824, %v822
    %v826 = vxor.u32 %v825, 2147483648
    %v827 = vsel %vm744, %v826, %v825
    %v828 = vsub.s32 4, %v804
    %v829 = vsel %vm744, %v828, %v804
    %v830 = vsel %vm743, %v216, %v827
    %v831 = vsel %vm743, 0, %v829
    %v832 = vcosq.f32.pop %v830
    %v833 = vsinq.f32.pop %v830
    %vm834 = vweird.f32 %v216
    %v835 = vand.u32 %v831, 3
    %vm836 = vcmp.lt.s32.totalorder %v835, 2
    %vm837 = vcmp.eq.s32.totalorder %v835, 0
    %v838 = vxor.u32 %v833, 2147483648
    %v839 = vsel %vm837, %v832, %v838
    %vm840 = vcmp.eq.s32.totalorder %v835, 2
    %v841 = vxor.u32 %v832, 2147483648
    %v842 = vsel %vm840, %v841, %v833
    %v843 = vsel %vm836, %v839, %v842
    %v844 = vsel %vm834, nan, %v843
    %v845 = vand.u32 2147483647, %v217
    %vm846 = vcmp.le.f32.partialorder %v845, 0.7853982
    %vm847 = vcmp.lt.s32.totalorder %v217, 0
    %v848 = vand.u32 %v217, 2139095040
    %v849 = vshrl.u32 %v848, 23
    %v850 = vsub.s32 %v849, 127
    %v851 = vand.u32 2147483647, %v217
    %v852 = vand.u32 %v851, 8388607
    %v853 = vor.u32 %v852, 8388608
    %v854 = vsub.s32 0, %v853
    %v855 = vadd.s32 %v850, 1
    %vm856 = vcmp.gt.s32.totalorder %v855, 0
    %v857 = vsel %vm856, %v855, 0
    %v858 = vshrl.u32 %v857, 5
    %v859 = vand.u32 %v857, 31
    %v860 = vsub.s32 32, %v859
    %v861 = vshrl.u32 683565275, %v860
    %v862 = vshll.u32 683565275, %v859
    %v863 = vshrl.u32 2475754826, %v860
    %v864 = vor.u32 %v862, %v863
    %v865 = vshll.u32 2475754826, %v859
    %v866 = vshrl.u32 2131351028, %v860
    %v867 = vor.u32 %v865, %v866
    %v868 = vshll.u32 2131351028, %v859
    %v869 = vshrl.u32 2102212464, %v860
    %v870 = vor.u32 %v868, %v869
    %v871 = vshll.u32 2102212464, %v859
    %v872 = vshrl.u32 920167782, %v860
    %v873 = vor.u32 %v871, %v872
    %v874 = vshll.u32 920167782, %v859
    %v875 = vshrl.u32 1326507024, %v860
    %v876 = vor.u32 %v874, %v875
    %vm877 = vcmp.lt.s32.totalorder %v858, 1
    %vm878 = vcmp.lt.s32.totalorder %v858, 2
    %vm879 = vcmp.lt.s32.totalorder %v858, 3
    %vm880 = vcmp.lt.s32.totalorder %v858, 4
    %v881 = vsel %vm877, %v861, %v864
    %v882 = vsel %vm880, %v870, 2102212464
    %v883 = vsel %vm879, %v867, %v882
    %v884 = vsel %vm878, %v881, %v883
    %v885 = vsel %vm877, %v864, %v867
    %v886 = vsel %vm880, %v873, 920167782
    %v887 = vsel %vm879, %v870, %v886
    %v888 = vsel %vm878, %v885, %v887
    %v889 = vsel %vm877, %v867, %v870
    %v890 = vsel %vm880, %v876, 1326507024
    %v891 = vsel %vm879, %v873, %v890
    %v892 = vsel %vm878, %v889, %v891
    %v893 = vshll.u32 %v853, 8
    %v894 = vmul.u32.u64.compose %v893, %v892
    %v895 = vextract.low.u32 %v894
    %v896 = vextract.high.u32 %v894
    %v897 = vmul.u32.u64.compose %v893, %v888
    %v898 = vextract.low.u32 %v897
    %v899 = vextract.high.u32 %v897
    %v900 = vmul.u32 %v893, %v884
    %v901 = vadd.s32 %v896, %v898
    %vm902 = vc.u32 %v896, %v898
    %v903 = vadd.s32 %v899, 1
    %v904 = vsel %vm902, %v903, %v899
    %v905 = vadd.s32 %v900, %v904
    %v906 = vadd.s32 %v905, 536870912
    %v907 = vshrl.u32 %v906, 30
    %v908 = vshll.u32 %v907, 30
    %v909 = vsub.s32 %v905, %v908
    %vm910 = vcmp.lt.s32.totalorder %v909, 0
    %v911 = vsub.s32 0, %v909
    %v912 = vsel %vm910, %v911, %v909
    %v913 = vclz %v912
    %v914 = vsub.s32 %v913, 2
    %vm915 = vcmp.gt.s32.totalorder 0, %v914
    %v916 = vsel %vm915, 0, %v914
    %v917 = vsub.s32 32, %v916
    %v918 = vshll.u32 %v909, %v916
    %v919 = vshrl.u32 %v901, %v917
    %v920 = vor.u32 %v918, %v919
    %v921 = vsub.s32 4294967266, %v916
    %v922 = vadd.s32 %v921, 127
    %v923 = vshll.u32 %v922, 23
    %v924 = vor.u32 4788187, %v923
    %v925 = vand.u32 2147483647, %v924
    %v927 = vcvt.s32.f32 %v920
    %v928 = vmul.f32 %v927, %v925
    %v929 = vxor.u32 %v928, 2147483648
    %v930 = vsel %vm847, %v929, %v928
    %v931 = vsub.s32 4, %v907
    %v932 = vsel %vm847, %v931, %v907
    %v933 = vsel %vm846, %v217, %v930
    %v934 = vsel %vm846, 0, %v932
    %v935 = vcosq.f32.pop %v933
    %v936 = vsinq.f32.pop %v933
    %vm937 = vweird.f32 %v217
    %v938 = vand.u32 %v934, 3
    %vm939 = vcmp.lt.s32.totalorder %v938, 2
    %vm940 = vcmp.eq.s32.totalorder %v938, 0
    %v941 = vxor.u32 %v936, 2147483648
    %v942 = vsel %vm940, %v935, %v941
    %vm943 = vcmp.eq.s32.totalorder %v938, 2
    %v944 = vxor.u32 %v935, 2147483648
    %v945 = vsel %vm943, %v944, %v936
    %v946 = vsel %vm939, %v942, %v945
    %v947 = vsel %vm937, nan, %v946
    %v948 = vand.u32 2147483647, %v218
    %vm949 = vcmp.le.f32.partialorder %v948, 0.7853982
    %vm950 = vcmp.lt.s32.totalorder %v218, 0
    %v951 = vand.u32 %v218, 2139095040
    %v952 = vshrl.u32 %v951, 23
    %v953 = vsub.s32 %v952, 127
    %v954 = vand.u32 2147483647, %v218
    %v955 = vand.u32 %v954, 8388607
    %v956 = vor.u32 %v955, 8388608
    %v957 = vsub.s32 0, %v956
    %v958 = vadd.s32 %v953, 1
    %vm959 = vcmp.gt.s32.totalorder %v958, 0
    %v960 = vsel %vm959, %v958, 0
    %v961 = vshrl.u32 %v960, 5
    %v962 = vand.u32 %v960, 31
    %v963 = vsub.s32 32, %v962
    %v964 = vshrl.u32 683565275, %v963
    %v965 = vshll.u32 683565275, %v962
    %v966 = vshrl.u32 2475754826, %v963
    %v967 = vor.u32 %v965, %v966
    %v968 = vshll.u32 2475754826, %v962
    %v969 = vshrl.u32 2131351028, %v963
    %v970 = vor.u32 %v968, %v969
    %v971 = vshll.u32 2131351028, %v962
    %v972 = vshrl.u32 2102212464, %v963
    %v973 = vor.u32 %v971, %v972
    %v974 = vshll.u32 2102212464, %v962
    %v975 = vshrl.u32 920167782, %v963
    %v976 = vor.u32 %v974, %v975
    %v977 = vshll.u32 920167782, %v962
    %v978 = vshrl.u32 1326507024, %v963
    %v979 = vor.u32 %v977, %v978
    %vm980 = vcmp.lt.s32.totalorder %v961, 1
    %vm981 = vcmp.lt.s32.totalorder %v961, 2
    %vm982 = vcmp.lt.s32.totalorder %v961, 3
    %vm983 = vcmp.lt.s32.totalorder %v961, 4
    %v984 = vsel %vm980, %v964, %v967
    %v985 = vsel %vm983, %v973, 2102212464
    %v986 = vsel %vm982, %v970, %v985
    %v987 = vsel %vm981, %v984, %v986
    %v988 = vsel %vm980, %v967, %v970
    %v989 = vsel %vm983, %v976, 920167782
    %v990 = vsel %vm982, %v973, %v989
    %v991 = vsel %vm981, %v988, %v990
    %v992 = vsel %vm980, %v970, %v973
    %v993 = vsel %vm983, %v979, 1326507024
    %v994 = vsel %vm982, %v976, %v993
    %v995 = vsel %vm981, %v992, %v994
    %v996 = vshll.u32 %v956, 8
    %v997 = vmul.u32.u64.compose %v996, %v995
    %v998 = vextract.low.u32 %v997
    %v999 = vextract.high.u32 %v997
    %v1000 = vmul.u32.u64.compose %v996, %v991
    %v1001 = vextract.low.u32 %v1000
    %v1002 = vextract.high.u32 %v1000
    %v1003 = vmul.u32 %v996, %v987
    %v1004 = vadd.s32 %v999, %v1001
    %vm1005 = vc.u32 %v999, %v1001
    %v1006 = vadd.s32 %v1002, 1
    %v1007 = vsel %vm1005, %v1006, %v1002
    %v1008 = vadd.s32 %v1003, %v1007
    %v1009 = vadd.s32 %v1008, 536870912
    %v1010 = vshrl.u32 %v1009, 30
    %v1011 = vshll.u32 %v1010, 30
    %v1012 = vsub.s32 %v1008, %v1011
    %vm1013 = vcmp.lt.s32.totalorder %v1012, 0
    %v1014 = vsub.s32 0, %v1012
    %v1015 = vsel %vm1013, %v1014, %v1012
    %v1016 = vclz %v1015
    %v1017 = vsub.s32 %v1016, 2
    %vm1018 = vcmp.gt.s32.totalorder 0, %v1017
    %v1019 = vsel %vm1018, 0, %v1017
    %v1020 = vsub.s32 32, %v1019
    %v1021 = vshll.u32 %v1012, %v1019
    %v1022 = vshrl.u32 %v1004, %v1020
    %v1023 = vor.u32 %v1021, %v1022
    %v1024 = vsub.s32 4294967266, %v1019
    %v1025 = vadd.s32 %v1024, 127
    %v1026 = vshll.u32 %v1025, 23
    %v1027 = vor.u32 4788187, %v1026
    %v1028 = vand.u32 2147483647, %v1027
    %v1030 = vcvt.s32.f32 %v1023
    %v1031 = vmul.f32 %v1030, %v1028
    %v1032 = vxor.u32 %v1031, 2147483648
    %v1033 = vsel %vm950, %v1032, %v1031
    %v1034 = vsub.s32 4, %v1010
    %v1035 = vsel %vm950, %v1034, %v1010
    %v1036 = vsel %vm949, %v218, %v1033
    %v1037 = vsel %vm949, 0, %v1035
    %v1038 = vcosq.f32.pop %v1036
    %v1039 = vsinq.f32.pop %v1036
    %vm1040 = vweird.f32 %v218
    %v1041 = vand.u32 %v1037, 3
    %vm1042 = vcmp.lt.s32.totalorder %v1041, 2
    %vm1043 = vcmp.eq.s32.totalorder %v1041, 0
    %v1044 = vxor.u32 %v1039, 2147483648
    %v1045 = vsel %vm1043, %v1038, %v1044
    %vm1046 = vcmp.eq.s32.totalorder %v1041, 2
    %v1047 = vxor.u32 %v1038, 2147483648
    %v1048 = vsel %vm1046, %v1047, %v1039
    %v1049 = vsel %vm1042, %v1045, %v1048
    %v1050 = vsel %vm1040, nan, %v1049
    %v1051 = vand.u32 2147483647, %v219
    %vm1052 = vcmp.le.f32.partialorder %v1051, 0.7853982
    %vm1053 = vcmp.lt.s32.totalorder %v219, 0
    %v1054 = vand.u32 %v219, 2139095040
    %v1055 = vshrl.u32 %v1054, 23
    %v1056 = vsub.s32 %v1055, 127
    %v1057 = vand.u32 2147483647, %v219
    %v1058 = vand.u32 %v1057, 8388607
    %v1059 = vor.u32 %v1058, 8388608
    %v1060 = vsub.s32 0, %v1059
    %v1061 = vadd.s32 %v1056, 1
    %vm1062 = vcmp.gt.s32.totalorder %v1061, 0
    %v1063 = vsel %vm1062, %v1061, 0
    %v1064 = vshrl.u32 %v1063, 5
    %v1065 = vand.u32 %v1063, 31
    %v1066 = vsub.s32 32, %v1065
    %v1067 = vshrl.u32 683565275, %v1066
    %v1068 = vshll.u32 683565275, %v1065
    %v1069 = vshrl.u32 2475754826, %v1066
    %v1070 = vor.u32 %v1068, %v1069
    %v1071 = vshll.u32 2475754826, %v1065
    %v1072 = vshrl.u32 2131351028, %v1066
    %v1073 = vor.u32 %v1071, %v1072
    %v1074 = vshll.u32 2131351028, %v1065
    %v1075 = vshrl.u32 2102212464, %v1066
    %v1076 = vor.u32 %v1074, %v1075
    %v1077 = vshll.u32 2102212464, %v1065
    %v1078 = vshrl.u32 920167782, %v1066
    %v1079 = vor.u32 %v1077, %v1078
    %v1080 = vshll.u32 920167782, %v1065
    %v1081 = vshrl.u32 1326507024, %v1066
    %v1082 = vor.u32 %v1080, %v1081
    %vm1083 = vcmp.lt.s32.totalorder %v1064, 1
    %vm1084 = vcmp.lt.s32.totalorder %v1064, 2
    %vm1085 = vcmp.lt.s32.totalorder %v1064, 3
    %vm1086 = vcmp.lt.s32.totalorder %v1064, 4
    %v1087 = vsel %vm1083, %v1067, %v1070
    %v1088 = vsel %vm1086, %v1076, 2102212464
    %v1089 = vsel %vm1085, %v1073, %v1088
    %v1090 = vsel %vm1084, %v1087, %v1089
    %v1091 = vsel %vm1083, %v1070, %v1073
    %v1092 = vsel %vm1086, %v1079, 920167782
    %v1093 = vsel %vm1085, %v1076, %v1092
    %v1094 = vsel %vm1084, %v1091, %v1093
    %v1095 = vsel %vm1083, %v1073, %v1076
    %v1096 = vsel %vm1086, %v1082, 1326507024
    %v1097 = vsel %vm1085, %v1079, %v1096
    %v1098 = vsel %vm1084, %v1095, %v1097
    %v1099 = vshll.u32 %v1059, 8
    %v1100 = vmul.u32.u64.compose %v1099, %v1098
    %v1101 = vextract.low.u32 %v1100
    %v1102 = vextract.high.u32 %v1100
    %v1103 = vmul.u32.u64.compose %v1099, %v1094
    %v1104 = vextract.low.u32 %v1103
    %v1105 = vextract.high.u32 %v1103
    %v1106 = vmul.u32 %v1099, %v1090
    %v1107 = vadd.s32 %v1102, %v1104
    %vm1108 = vc.u32 %v1102, %v1104
    %v1109 = vadd.s32 %v1105, 1
    %v1110 = vsel %vm1108, %v1109, %v1105
    %v1111 = vadd.s32 %v1106, %v1110
    %v1112 = vadd.s32 %v1111, 536870912
    %v1113 = vshrl.u32 %v1112, 30
    %v1114 = vshll.u32 %v1113, 30
    %v1115 = vsub.s32 %v1111, %v1114
    %vm1116 = vcmp.lt.s32.totalorder %v1115, 0
    %v1117 = vsub.s32 0, %v1115
    %v1118 = vsel %vm1116, %v1117, %v1115
    %v1119 = vclz %v1118
    %v1120 = vsub.s32 %v1119, 2
    %vm1121 = vcmp.gt.s32.totalorder 0, %v1120
    %v1122 = vsel %vm1121, 0, %v1120
    %v1123 = vsub.s32 32, %v1122
    %v1124 = vshll.u32 %v1115, %v1122
    %v1125 = vshrl.u32 %v1107, %v1123
    %v1126 = vor.u32 %v1124, %v1125
    %v1127 = vsub.s32 4294967266, %v1122
    %v1128 = vadd.s32 %v1127, 127
    %v1129 = vshll.u32 %v1128, 23
    %v1130 = vor.u32 4788187, %v1129
    %v1131 = vand.u32 2147483647, %v1130
    %v1133 = vcvt.s32.f32 %v1126
    %v1134 = vmul.f32 %v1133, %v1131
    %v1135 = vxor.u32 %v1134, 2147483648
    %v1136 = vsel %vm1053, %v1135, %v1134
    %v1137 = vsub.s32 4, %v1113
    %v1138 = vsel %vm1053, %v1137, %v1113
    %v1139 = vsel %vm1052, %v219, %v1136
    %v1140 = vsel %vm1052, 0, %v1138
    %v1141 = vcosq.f32.pop %v1139
    %v1142 = vsinq.f32.pop %v1139
    %vm1143 = vweird.f32 %v219
    %v1144 = vand.u32 %v1140, 3
    %vm1145 = vcmp.lt.s32.totalorder %v1144, 2
    %vm1146 = vcmp.eq.s32.totalorder %v1144, 0
    %v1147 = vxor.u32 %v1142, 2147483648
    %v1148 = vsel %vm1146, %v1141, %v1147
    %vm1149 = vcmp.eq.s32.totalorder %v1144, 2
    %v1150 = vxor.u32 %v1141, 2147483648
    %v1151 = vsel %vm1149, %v1150, %v1142
    %v1152 = vsel %vm1145, %v1148, %v1151
    %v1153 = vsel %vm1143, nan, %v1152
    %v1154 = vand.u32 2147483647, %v220
    %vm1155 = vcmp.le.f32.partialorder %v1154, 0.7853982
    %vm1156 = vcmp.lt.s32.totalorder %v220, 0
    %v1157 = vand.u32 %v220, 2139095040
    %v1158 = vshrl.u32 %v1157, 23
    %v1159 = vsub.s32 %v1158, 127
    %v1160 = vand.u32 2147483647, %v220
    %v1161 = vand.u32 %v1160, 8388607
    %v1162 = vor.u32 %v1161, 8388608
    %v1163 = vsub.s32 0, %v1162
    %v1164 = vadd.s32 %v1159, 1
    %vm1165 = vcmp.gt.s32.totalorder %v1164, 0
    %v1166 = vsel %vm1165, %v1164, 0
    %v1167 = vshrl.u32 %v1166, 5
    %v1168 = vand.u32 %v1166, 31
    %v1169 = vsub.s32 32, %v1168
    %v1170 = vshrl.u32 683565275, %v1169
    %v1171 = vshll.u32 683565275, %v1168
    %v1172 = vshrl.u32 2475754826, %v1169
    %v1173 = vor.u32 %v1171, %v1172
    %v1174 = vshll.u32 2475754826, %v1168
    %v1175 = vshrl.u32 2131351028, %v1169
    %v1176 = vor.u32 %v1174, %v1175
    %v1177 = vshll.u32 2131351028, %v1168
    %v1178 = vshrl.u32 2102212464, %v1169
    %v1179 = vor.u32 %v1177, %v1178
    %v1180 = vshll.u32 2102212464, %v1168
    %v1181 = vshrl.u32 920167782, %v1169
    %v1182 = vor.u32 %v1180, %v1181
    %v1183 = vshll.u32 920167782, %v1168
    %v1184 = vshrl.u32 1326507024, %v1169
    %v1185 = vor.u32 %v1183, %v1184
    %vm1186 = vcmp.lt.s32.totalorder %v1167, 1
    %vm1187 = vcmp.lt.s32.totalorder %v1167, 2
    %vm1188 = vcmp.lt.s32.totalorder %v1167, 3
    %vm1189 = vcmp.lt.s32.totalorder %v1167, 4
    %v1190 = vsel %vm1186, %v1170, %v1173
    %v1191 = vsel %vm1189, %v1179, 2102212464
    %v1192 = vsel %vm1188, %v1176, %v1191
    %v1193 = vsel %vm1187, %v1190, %v1192
    %v1194 = vsel %vm1186, %v1173, %v1176
    %v1195 = vsel %vm1189, %v1182, 920167782
    %v1196 = vsel %vm1188, %v1179, %v1195
    %v1197 = vsel %vm1187, %v1194, %v1196
    %v1198 = vsel %vm1186, %v1176, %v1179
    %v1199 = vsel %vm1189, %v1185, 1326507024
    %v1200 = vsel %vm1188, %v1182, %v1199
    %v1201 = vsel %vm1187, %v1198, %v1200
    %v1202 = vshll.u32 %v1162, 8
    %v1203 = vmul.u32.u64.compose %v1202, %v1201
    %v1204 = vextract.low.u32 %v1203
    %v1205 = vextract.high.u32 %v1203
    %v1206 = vmul.u32.u64.compose %v1202, %v1197
    %v1207 = vextract.low.u32 %v1206
    %v1208 = vextract.high.u32 %v1206
    %v1209 = vmul.u32 %v1202, %v1193
    %v1210 = vadd.s32 %v1205, %v1207
    %vm1211 = vc.u32 %v1205, %v1207
    %v1212 = vadd.s32 %v1208, 1
    %v1213 = vsel %vm1211, %v1212, %v1208
    %v1214 = vadd.s32 %v1209, %v1213
    %v1215 = vadd.s32 %v1214, 536870912
    %v1216 = vshrl.u32 %v1215, 30
    %v1217 = vshll.u32 %v1216, 30
    %v1218 = vsub.s32 %v1214, %v1217
    %vm1219 = vcmp.lt.s32.totalorder %v1218, 0
    %v1220 = vsub.s32 0, %v1218
    %v1221 = vsel %vm1219, %v1220, %v1218
    %v1222 = vclz %v1221
    %v1223 = vsub.s32 %v1222, 2
    %vm1224 = vcmp.gt.s32.totalorder 0, %v1223
    %v1225 = vsel %vm1224, 0, %v1223
    %v1226 = vsub.s32 32, %v1225
    %v1227 = vshll.u32 %v1218, %v1225
    %v1228 = vshrl.u32 %v1210, %v1226
    %v1229 = vor.u32 %v1227, %v1228
    %v1230 = vsub.s32 4294967266, %v1225
    %v1231 = vadd.s32 %v1230, 127
    %v1232 = vshll.u32 %v1231, 23
    %v1233 = vor.u32 4788187, %v1232
    %v1234 = vand.u32 2147483647, %v1233
    %v1236 = vcvt.s32.f32 %v1229
    %v1237 = vmul.f32 %v1236, %v1234
    %v1238 = vxor.u32 %v1237, 2147483648
    %v1239 = vsel %vm1156, %v1238, %v1237
    %v1240 = vsub.s32 4, %v1216
    %v1241 = vsel %vm1156, %v1240, %v1216
    %v1242 = vsel %vm1155, %v220, %v1239
    %v1243 = vsel %vm1155, 0, %v1241
    %v1244 = vcosq.f32.pop %v1242
    %v1245 = vsinq.f32.pop %v1242
    %vm1246 = vweird.f32 %v220
    %v1247 = vand.u32 %v1243, 3
    %vm1248 = vcmp.lt.s32.totalorder %v1247, 2
    %vm1249 = vcmp.eq.s32.totalorder %v1247, 0
    %v1250 = vxor.u32 %v1245, 2147483648
    %v1251 = vsel %vm1249, %v1244, %v1250
    %vm1252 = vcmp.eq.s32.totalorder %v1247, 2
    %v1253 = vxor.u32 %v1244, 2147483648
    %v1254 = vsel %vm1252, %v1253, %v1245
    %v1255 = vsel %vm1248, %v1251, %v1254
    %v1256 = vsel %vm1246, nan, %v1255
    %v1257 = vand.u32 2147483647, %v221
    %vm1258 = vcmp.le.f32.partialorder %v1257, 0.7853982
    %vm1259 = vcmp.lt.s32.totalorder %v221, 0
    %v1260 = vand.u32 %v221, 2139095040
    %v1261 = vshrl.u32 %v1260, 23
    %v1262 = vsub.s32 %v1261, 127
    %v1263 = vand.u32 2147483647, %v221
    %v1264 = vand.u32 %v1263, 8388607
    %v1265 = vor.u32 %v1264, 8388608
    %v1266 = vsub.s32 0, %v1265
    %v1267 = vadd.s32 %v1262, 1
    %vm1268 = vcmp.gt.s32.totalorder %v1267, 0
    %v1269 = vsel %vm1268, %v1267, 0
    %v1270 = vshrl.u32 %v1269, 5
    %v1271 = vand.u32 %v1269, 31
    %v1272 = vsub.s32 32, %v1271
    %v1273 = vshrl.u32 683565275, %v1272
    %v1274 = vshll.u32 683565275, %v1271
    %v1275 = vshrl.u32 2475754826, %v1272
    %v1276 = vor.u32 %v1274, %v1275
    %v1277 = vshll.u32 2475754826, %v1271
    %v1278 = vshrl.u32 2131351028, %v1272
    %v1279 = vor.u32 %v1277, %v1278
    %v1280 = vshll.u32 2131351028, %v1271
    %v1281 = vshrl.u32 2102212464, %v1272
    %v1282 = vor.u32 %v1280, %v1281
    %v1283 = vshll.u32 2102212464, %v1271
    %v1284 = vshrl.u32 920167782, %v1272
    %v1285 = vor.u32 %v1283, %v1284
    %v1286 = vshll.u32 920167782, %v1271
    %v1287 = vshrl.u32 1326507024, %v1272
    %v1288 = vor.u32 %v1286, %v1287
    %vm1289 = vcmp.lt.s32.totalorder %v1270, 1
    %vm1290 = vcmp.lt.s32.totalorder %v1270, 2
    %vm1291 = vcmp.lt.s32.totalorder %v1270, 3
    %vm1292 = vcmp.lt.s32.totalorder %v1270, 4
    %v1293 = vsel %vm1289, %v1273, %v1276
    %v1294 = vsel %vm1292, %v1282, 2102212464
    %v1295 = vsel %vm1291, %v1279, %v1294
    %v1296 = vsel %vm1290, %v1293, %v1295
    %v1297 = vsel %vm1289, %v1276, %v1279
    %v1298 = vsel %vm1292, %v1285, 920167782
    %v1299 = vsel %vm1291, %v1282, %v1298
    %v1300 = vsel %vm1290, %v1297, %v1299
    %v1301 = vsel %vm1289, %v1279, %v1282
    %v1302 = vsel %vm1292, %v1288, 1326507024
    %v1303 = vsel %vm1291, %v1285, %v1302
    %v1304 = vsel %vm1290, %v1301, %v1303
    %v1305 = vshll.u32 %v1265, 8
    %v1306 = vmul.u32.u64.compose %v1305, %v1304
    %v1307 = vextract.low.u32 %v1306
    %v1308 = vextract.high.u32 %v1306
    %v1309 = vmul.u32.u64.compose %v1305, %v1300
    %v1310 = vextract.low.u32 %v1309
    %v1311 = vextract.high.u32 %v1309
    %v1312 = vmul.u32 %v1305, %v1296
    %v1313 = vadd.s32 %v1308, %v1310
    %vm1314 = vc.u32 %v1308, %v1310
    %v1315 = vadd.s32 %v1311, 1
    %v1316 = vsel %vm1314, %v1315, %v1311
    %v1317 = vadd.s32 %v1312, %v1316
    %v1318 = vadd.s32 %v1317, 536870912
    %v1319 = vshrl.u32 %v1318, 30
    %v1320 = vshll.u32 %v1319, 30
    %v1321 = vsub.s32 %v1317, %v1320
    %vm1322 = vcmp.lt.s32.totalorder %v1321, 0
    %v1323 = vsub.s32 0, %v1321
    %v1324 = vsel %vm1322, %v1323, %v1321
    %v1325 = vclz %v1324
    %v1326 = vsub.s32 %v1325, 2
    %vm1327 = vcmp.gt.s32.totalorder 0, %v1326
    %v1328 = vsel %vm1327, 0, %v1326
    %v1329 = vsub.s32 32, %v1328
    %v1330 = vshll.u32 %v1321, %v1328
    %v1331 = vshrl.u32 %v1313, %v1329
    %v1332 = vor.u32 %v1330, %v1331
    %v1333 = vsub.s32 4294967266, %v1328
    %v1334 = vadd.s32 %v1333, 127
    %v1335 = vshll.u32 %v1334, 23
    %v1336 = vor.u32 4788187, %v1335
    %v1337 = vand.u32 2147483647, %v1336
    %v1339 = vcvt.s32.f32 %v1332
    %v1340 = vmul.f32 %v1339, %v1337
    %v1341 = vxor.u32 %v1340, 2147483648
    %v1342 = vsel %vm1259, %v1341, %v1340
    %v1343 = vsub.s32 4, %v1319
    %v1344 = vsel %vm1259, %v1343, %v1319
    %v1345 = vsel %vm1258, %v221, %v1342
    %v1346 = vsel %vm1258, 0, %v1344
    %v1347 = vcosq.f32.pop %v1345
    %v1348 = vsinq.f32.pop %v1345
    %vm1349 = vweird.f32 %v221
    %v1350 = vand.u32 %v1346, 3
    %vm1351 = vcmp.lt.s32.totalorder %v1350, 2
    %vm1352 = vcmp.eq.s32.totalorder %v1350, 0
    %v1353 = vxor.u32 %v1348, 2147483648
    %v1354 = vsel %vm1352, %v1347, %v1353
    %vm1355 = vcmp.eq.s32.totalorder %v1350, 2
    %v1356 = vxor.u32 %v1347, 2147483648
    %v1357 = vsel %vm1355, %v1356, %v1348
    %v1358 = vsel %vm1351, %v1354, %v1357
    %v1359 = vsel %vm1349, nan, %v1358
    %v1360 = vand.u32 2147483647, %v222
    %vm1361 = vcmp.le.f32.partialorder %v1360, 0.7853982
    %vm1362 = vcmp.lt.s32.totalorder %v222, 0
    %v1363 = vand.u32 %v222, 2139095040
    %v1364 = vshrl.u32 %v1363, 23
    %v1365 = vsub.s32 %v1364, 127
    %v1366 = vand.u32 2147483647, %v222
    %v1367 = vand.u32 %v1366, 8388607
    %v1368 = vor.u32 %v1367, 8388608
    %v1369 = vsub.s32 0, %v1368
    %v1370 = vadd.s32 %v1365, 1
    %vm1371 = vcmp.gt.s32.totalorder %v1370, 0
    %v1372 = vsel %vm1371, %v1370, 0
    %v1373 = vshrl.u32 %v1372, 5
    %v1374 = vand.u32 %v1372, 31
    %v1375 = vsub.s32 32, %v1374
    %v1376 = vshrl.u32 683565275, %v1375
    %v1377 = vshll.u32 683565275, %v1374
    %v1378 = vshrl.u32 2475754826, %v1375
    %v1379 = vor.u32 %v1377, %v1378
    %v1380 = vshll.u32 2475754826, %v1374
    %v1381 = vshrl.u32 2131351028, %v1375
    %v1382 = vor.u32 %v1380, %v1381
    %v1383 = vshll.u32 2131351028, %v1374
    %v1384 = vshrl.u32 2102212464, %v1375
    %v1385 = vor.u32 %v1383, %v1384
    %v1386 = vshll.u32 2102212464, %v1374
    %v1387 = vshrl.u32 920167782, %v1375
    %v1388 = vor.u32 %v1386, %v1387
    %v1389 = vshll.u32 920167782, %v1374
    %v1390 = vshrl.u32 1326507024, %v1375
    %v1391 = vor.u32 %v1389, %v1390
    %vm1392 = vcmp.lt.s32.totalorder %v1373, 1
    %vm1393 = vcmp.lt.s32.totalorder %v1373, 2
    %vm1394 = vcmp.lt.s32.totalorder %v1373, 3
    %vm1395 = vcmp.lt.s32.totalorder %v1373, 4
    %v1396 = vsel %vm1392, %v1376, %v1379
    %v1397 = vsel %vm1395, %v1385, 2102212464
    %v1398 = vsel %vm1394, %v1382, %v1397
    %v1399 = vsel %vm1393, %v1396, %v1398
    %v1400 = vsel %vm1392, %v1379, %v1382
    %v1401 = vsel %vm1395, %v1388, 920167782
    %v1402 = vsel %vm1394, %v1385, %v1401
    %v1403 = vsel %vm1393, %v1400, %v1402
    %v1404 = vsel %vm1392, %v1382, %v1385
    %v1405 = vsel %vm1395, %v1391, 1326507024
    %v1406 = vsel %vm1394, %v1388, %v1405
    %v1407 = vsel %vm1393, %v1404, %v1406
    %v1408 = vshll.u32 %v1368, 8
    %v1409 = vmul.u32.u64.compose %v1408, %v1407
    %v1410 = vextract.low.u32 %v1409
    %v1411 = vextract.high.u32 %v1409
    %v1412 = vmul.u32.u64.compose %v1408, %v1403
    %v1413 = vextract.low.u32 %v1412
    %v1414 = vextract.high.u32 %v1412
    %v1415 = vmul.u32 %v1408, %v1399
    %v1416 = vadd.s32 %v1411, %v1413
    %vm1417 = vc.u32 %v1411, %v1413
    %v1418 = vadd.s32 %v1414, 1
    %v1419 = vsel %vm1417, %v1418, %v1414
    %v1420 = vadd.s32 %v1415, %v1419
    %v1421 = vadd.s32 %v1420, 536870912
    %v1422 = vshrl.u32 %v1421, 30
    %v1423 = vshll.u32 %v1422, 30
    %v1424 = vsub.s32 %v1420, %v1423
    %vm1425 = vcmp.lt.s32.totalorder %v1424, 0
    %v1426 = vsub.s32 0, %v1424
    %v1427 = vsel %vm1425, %v1426, %v1424
    %v1428 = vclz %v1427
    %v1429 = vsub.s32 %v1428, 2
    %vm1430 = vcmp.gt.s32.totalorder 0, %v1429
    %v1431 = vsel %vm1430, 0, %v1429
    %v1432 = vsub.s32 32, %v1431
    %v1433 = vshll.u32 %v1424, %v1431
    %v1434 = vshrl.u32 %v1416, %v1432
    %v1435 = vor.u32 %v1433, %v1434
    %v1436 = vsub.s32 4294967266, %v1431
    %v1437 = vadd.s32 %v1436, 127
    %v1438 = vshll.u32 %v1437, 23
    %v1439 = vor.u32 4788187, %v1438
    %v1440 = vand.u32 2147483647, %v1439
    %v1442 = vcvt.s32.f32 %v1435
    %v1443 = vmul.f32 %v1442, %v1440
    %v1444 = vxor.u32 %v1443, 2147483648
    %v1445 = vsel %vm1362, %v1444, %v1443
    %v1446 = vsub.s32 4, %v1422
    %v1447 = vsel %vm1362, %v1446, %v1422
    %v1448 = vsel %vm1361, %v222, %v1445
    %v1449 = vsel %vm1361, 0, %v1447
    %v1450 = vcosq.f32.pop %v1448
    %v1451 = vsinq.f32.pop %v1448
    %vm1452 = vweird.f32 %v222
    %v1453 = vand.u32 %v1449, 3
    %vm1454 = vcmp.lt.s32.totalorder %v1453, 2
    %vm1455 = vcmp.eq.s32.totalorder %v1453, 0
    %v1456 = vxor.u32 %v1451, 2147483648
    %v1457 = vsel %vm1455, %v1450, %v1456
    %vm1458 = vcmp.eq.s32.totalorder %v1453, 2
    %v1459 = vxor.u32 %v1450, 2147483648
    %v1460 = vsel %vm1458, %v1459, %v1451
    %v1461 = vsel %vm1454, %v1457, %v1460
    %v1462 = vsel %vm1452, nan, %v1461
    %v1463 = vand.u32 2147483647, %v223
    %vm1464 = vcmp.le.f32.partialorder %v1463, 0.7853982
    %vm1465 = vcmp.lt.s32.totalorder %v223, 0
    %v1466 = vand.u32 %v223, 2139095040
    %v1467 = vshrl.u32 %v1466, 23
    %v1468 = vsub.s32 %v1467, 127
    %v1469 = vand.u32 2147483647, %v223
    %v1470 = vand.u32 %v1469, 8388607
    %v1471 = vor.u32 %v1470, 8388608
    %v1472 = vsub.s32 0, %v1471
    %v1473 = vadd.s32 %v1468, 1
    %vm1474 = vcmp.gt.s32.totalorder %v1473, 0
    %v1475 = vsel %vm1474, %v1473, 0
    %v1476 = vshrl.u32 %v1475, 5
    %v1477 = vand.u32 %v1475, 31
    %v1478 = vsub.s32 32, %v1477
    %v1479 = vshrl.u32 683565275, %v1478
    %v1480 = vshll.u32 683565275, %v1477
    %v1481 = vshrl.u32 2475754826, %v1478
    %v1482 = vor.u32 %v1480, %v1481
    %v1483 = vshll.u32 2475754826, %v1477
    %v1484 = vshrl.u32 2131351028, %v1478
    %v1485 = vor.u32 %v1483, %v1484
    %v1486 = vshll.u32 2131351028, %v1477
    %v1487 = vshrl.u32 2102212464, %v1478
    %v1488 = vor.u32 %v1486, %v1487
    %v1489 = vshll.u32 2102212464, %v1477
    %v1490 = vshrl.u32 920167782, %v1478
    %v1491 = vor.u32 %v1489, %v1490
    %v1492 = vshll.u32 920167782, %v1477
    %v1493 = vshrl.u32 1326507024, %v1478
    %v1494 = vor.u32 %v1492, %v1493
    %vm1495 = vcmp.lt.s32.totalorder %v1476, 1
    %vm1496 = vcmp.lt.s32.totalorder %v1476, 2
    %vm1497 = vcmp.lt.s32.totalorder %v1476, 3
    %vm1498 = vcmp.lt.s32.totalorder %v1476, 4
    %v1499 = vsel %vm1495, %v1479, %v1482
    %v1500 = vsel %vm1498, %v1488, 2102212464
    %v1501 = vsel %vm1497, %v1485, %v1500
    %v1502 = vsel %vm1496, %v1499, %v1501
    %v1503 = vsel %vm1495, %v1482, %v1485
    %v1504 = vsel %vm1498, %v1491, 920167782
    %v1505 = vsel %vm1497, %v1488, %v1504
    %v1506 = vsel %vm1496, %v1503, %v1505
    %v1507 = vsel %vm1495, %v1485, %v1488
    %v1508 = vsel %vm1498, %v1494, 1326507024
    %v1509 = vsel %vm1497, %v1491, %v1508
    %v1510 = vsel %vm1496, %v1507, %v1509
    %v1511 = vshll.u32 %v1471, 8
    %v1512 = vmul.u32.u64.compose %v1511, %v1510
    %v1513 = vextract.low.u32 %v1512
    %v1514 = vextract.high.u32 %v1512
    %v1515 = vmul.u32.u64.compose %v1511, %v1506
    %v1516 = vextract.low.u32 %v1515
    %v1517 = vextract.high.u32 %v1515
    %v1518 = vmul.u32 %v1511, %v1502
    %v1519 = vadd.s32 %v1514, %v1516
    %vm1520 = vc.u32 %v1514, %v1516
    %v1521 = vadd.s32 %v1517, 1
    %v1522 = vsel %vm1520, %v1521, %v1517
    %v1523 = vadd.s32 %v1518, %v1522
    %v1524 = vadd.s32 %v1523, 536870912
    %v1525 = vshrl.u32 %v1524, 30
    %v1526 = vshll.u32 %v1525, 30
    %v1527 = vsub.s32 %v1523, %v1526
    %vm1528 = vcmp.lt.s32.totalorder %v1527, 0
    %v1529 = vsub.s32 0, %v1527
    %v1530 = vsel %vm1528, %v1529, %v1527
    %v1531 = vclz %v1530
    %v1532 = vsub.s32 %v1531, 2
    %vm1533 = vcmp.gt.s32.totalorder 0, %v1532
    %v1534 = vsel %vm1533, 0, %v1532
    %v1535 = vsub.s32 32, %v1534
    %v1536 = vshll.u32 %v1527, %v1534
    %v1537 = vshrl.u32 %v1519, %v1535
    %v1538 = vor.u32 %v1536, %v1537
    %v1539 = vsub.s32 4294967266, %v1534
    %v1540 = vadd.s32 %v1539, 127
    %v1541 = vshll.u32 %v1540, 23
    %v1542 = vor.u32 4788187, %v1541
    %v1543 = vand.u32 2147483647, %v1542
    %v1545 = vcvt.s32.f32 %v1538
    %v1546 = vmul.f32 %v1545, %v1543
    %v1547 = vxor.u32 %v1546, 2147483648
    %v1548 = vsel %vm1465, %v1547, %v1546
    %v1549 = vsub.s32 4, %v1525
    %v1550 = vsel %vm1465, %v1549, %v1525
    %v1551 = vsel %vm1464, %v223, %v1548
    %v1552 = vsel %vm1464, 0, %v1550
    %v1553 = vcosq.f32.pop %v1551
    %v1554 = vsinq.f32.pop %v1551
    %vm1555 = vweird.f32 %v223
    %v1556 = vand.u32 %v1552, 3
    %vm1557 = vcmp.lt.s32.totalorder %v1556, 2
    %vm1558 = vcmp.eq.s32.totalorder %v1556, 0
    %v1559 = vxor.u32 %v1554, 2147483648
    %v1560 = vsel %vm1558, %v1553, %v1559
    %vm1561 = vcmp.eq.s32.totalorder %v1556, 2
    %v1562 = vxor.u32 %v1553, 2147483648
    %v1563 = vsel %vm1561, %v1562, %v1554
    %v1564 = vsel %vm1557, %v1560, %v1563
    %v1565 = vsel %vm1555, nan, %v1564
    %v1566 = vand.u32 2147483647, %v224
    %vm1567 = vcmp.le.f32.partialorder %v1566, 0.7853982
    %vm1568 = vcmp.lt.s32.totalorder %v224, 0
    %v1569 = vand.u32 %v224, 2139095040
    %v1570 = vshrl.u32 %v1569, 23
    %v1571 = vsub.s32 %v1570, 127
    %v1572 = vand.u32 2147483647, %v224
    %v1573 = vand.u32 %v1572, 8388607
    %v1574 = vor.u32 %v1573, 8388608
    %v1575 = vsub.s32 0, %v1574
    %v1576 = vadd.s32 %v1571, 1
    %vm1577 = vcmp.gt.s32.totalorder %v1576, 0
    %v1578 = vsel %vm1577, %v1576, 0
    %v1579 = vshrl.u32 %v1578, 5
    %v1580 = vand.u32 %v1578, 31
    %v1581 = vsub.s32 32, %v1580
    %v1582 = vshrl.u32 683565275, %v1581
    %v1583 = vshll.u32 683565275, %v1580
    %v1584 = vshrl.u32 2475754826, %v1581
    %v1585 = vor.u32 %v1583, %v1584
    %v1586 = vshll.u32 2475754826, %v1580
    %v1587 = vshrl.u32 2131351028, %v1581
    %v1588 = vor.u32 %v1586, %v1587
    %v1589 = vshll.u32 2131351028, %v1580
    %v1590 = vshrl.u32 2102212464, %v1581
    %v1591 = vor.u32 %v1589, %v1590
    %v1592 = vshll.u32 2102212464, %v1580
    %v1593 = vshrl.u32 920167782, %v1581
    %v1594 = vor.u32 %v1592, %v1593
    %v1595 = vshll.u32 920167782, %v1580
    %v1596 = vshrl.u32 1326507024, %v1581
    %v1597 = vor.u32 %v1595, %v1596
    %vm1598 = vcmp.lt.s32.totalorder %v1579, 1
    %vm1599 = vcmp.lt.s32.totalorder %v1579, 2
    %vm1600 = vcmp.lt.s32.totalorder %v1579, 3
    %vm1601 = vcmp.lt.s32.totalorder %v1579, 4
    %v1602 = vsel %vm1598, %v1582, %v1585
    %v1603 = vsel %vm1601, %v1591, 2102212464
    %v1604 = vsel %vm1600, %v1588, %v1603
    %v1605 = vsel %vm1599, %v1602, %v1604
    %v1606 = vsel %vm1598, %v1585, %v1588
    %v1607 = vsel %vm1601, %v1594, 920167782
    %v1608 = vsel %vm1600, %v1591, %v1607
    %v1609 = vsel %vm1599, %v1606, %v1608
    %v1610 = vsel %vm1598, %v1588, %v1591
    %v1611 = vsel %vm1601, %v1597, 1326507024
    %v1612 = vsel %vm1600, %v1594, %v1611
    %v1613 = vsel %vm1599, %v1610, %v1612
    %v1614 = vshll.u32 %v1574, 8
    %v1615 = vmul.u32.u64.compose %v1614, %v1613
    %v1616 = vextract.low.u32 %v1615
    %v1617 = vextract.high.u32 %v1615
    %v1618 = vmul.u32.u64.compose %v1614, %v1609
    %v1619 = vextract.low.u32 %v1618
    %v1620 = vextract.high.u32 %v1618
    %v1621 = vmul.u32 %v1614, %v1605
    %v1622 = vadd.s32 %v1617, %v1619
    %vm1623 = vc.u32 %v1617, %v1619
    %v1624 = vadd.s32 %v1620, 1
    %v1625 = vsel %vm1623, %v1624, %v1620
    %v1626 = vadd.s32 %v1621, %v1625
    %v1627 = vadd.s32 %v1626, 536870912
    %v1628 = vshrl.u32 %v1627, 30
    %v1629 = vshll.u32 %v1628, 30
    %v1630 = vsub.s32 %v1626, %v1629
    %vm1631 = vcmp.lt.s32.totalorder %v1630, 0
    %v1632 = vsub.s32 0, %v1630
    %v1633 = vsel %vm1631, %v1632, %v1630
    %v1634 = vclz %v1633
    %v1635 = vsub.s32 %v1634, 2
    %vm1636 = vcmp.gt.s32.totalorder 0, %v1635
    %v1637 = vsel %vm1636, 0, %v1635
    %v1638 = vsub.s32 32, %v1637
    %v1639 = vshll.u32 %v1630, %v1637
    %v1640 = vshrl.u32 %v1622, %v1638
    %v1641 = vor.u32 %v1639, %v1640
    %v1642 = vsub.s32 4294967266, %v1637
    %v1643 = vadd.s32 %v1642, 127
    %v1644 = vshll.u32 %v1643, 23
    %v1645 = vor.u32 4788187, %v1644
    %v1646 = vand.u32 2147483647, %v1645
    %v1648 = vcvt.s32.f32 %v1641
    %v1649 = vmul.f32 %v1648, %v1646
    %v1650 = vxor.u32 %v1649, 2147483648
    %v1651 = vsel %vm1568, %v1650, %v1649
    %v1652 = vsub.s32 4, %v1628
    %v1653 = vsel %vm1568, %v1652, %v1628
    %v1654 = vsel %vm1567, %v224, %v1651
    %v1655 = vsel %vm1567, 0, %v1653
    %v1656 = vcosq.f32.pop %v1654
    %v1657 = vsinq.f32.pop %v1654
    %vm1658 = vweird.f32 %v224
    %v1659 = vand.u32 %v1655, 3
    %vm1660 = vcmp.lt.s32.totalorder %v1659, 2
    %vm1661 = vcmp.eq.s32.totalorder %v1659, 0
    %v1662 = vxor.u32 %v1657, 2147483648
    %v1663 = vsel %vm1661, %v1656, %v1662
    %vm1664 = vcmp.eq.s32.totalorder %v1659, 2
    %v1665 = vxor.u32 %v1656, 2147483648
    %v1666 = vsel %vm1664, %v1665, %v1657
    %v1667 = vsel %vm1660, %v1663, %v1666
    %v1668 = vsel %vm1658, nan, %v1667
    %v1669 = vand.u32 2147483647, %v225
    %vm1670 = vcmp.le.f32.partialorder %v1669, 0.7853982
    %vm1671 = vcmp.lt.s32.totalorder %v225, 0
    %v1672 = vand.u32 %v225, 2139095040
    %v1673 = vshrl.u32 %v1672, 23
    %v1674 = vsub.s32 %v1673, 127
    %v1675 = vand.u32 2147483647, %v225
    %v1676 = vand.u32 %v1675, 8388607
    %v1677 = vor.u32 %v1676, 8388608
    %v1678 = vsub.s32 0, %v1677
    %v1679 = vadd.s32 %v1674, 1
    %vm1680 = vcmp.gt.s32.totalorder %v1679, 0
    %v1681 = vsel %vm1680, %v1679, 0
    %v1682 = vshrl.u32 %v1681, 5
    %v1683 = vand.u32 %v1681, 31
    %v1684 = vsub.s32 32, %v1683
    %v1685 = vshrl.u32 683565275, %v1684
    %v1686 = vshll.u32 683565275, %v1683
    %v1687 = vshrl.u32 2475754826, %v1684
    %v1688 = vor.u32 %v1686, %v1687
    %v1689 = vshll.u32 2475754826, %v1683
    %v1690 = vshrl.u32 2131351028, %v1684
    %v1691 = vor.u32 %v1689, %v1690
    %v1692 = vshll.u32 2131351028, %v1683
    %v1693 = vshrl.u32 2102212464, %v1684
    %v1694 = vor.u32 %v1692, %v1693
    %v1695 = vshll.u32 2102212464, %v1683
    %v1696 = vshrl.u32 920167782, %v1684
    %v1697 = vor.u32 %v1695, %v1696
    %v1698 = vshll.u32 920167782, %v1683
    %v1699 = vshrl.u32 1326507024, %v1684
    %v1700 = vor.u32 %v1698, %v1699
    %vm1701 = vcmp.lt.s32.totalorder %v1682, 1
    %vm1702 = vcmp.lt.s32.totalorder %v1682, 2
    %vm1703 = vcmp.lt.s32.totalorder %v1682, 3
    %vm1704 = vcmp.lt.s32.totalorder %v1682, 4
    %v1705 = vsel %vm1701, %v1685, %v1688
    %v1706 = vsel %vm1704, %v1694, 2102212464
    %v1707 = vsel %vm1703, %v1691, %v1706
    %v1708 = vsel %vm1702, %v1705, %v1707
    %v1709 = vsel %vm1701, %v1688, %v1691
    %v1710 = vsel %vm1704, %v1697, 920167782
    %v1711 = vsel %vm1703, %v1694, %v1710
    %v1712 = vsel %vm1702, %v1709, %v1711
    %v1713 = vsel %vm1701, %v1691, %v1694
    %v1714 = vsel %vm1704, %v1700, 1326507024
    %v1715 = vsel %vm1703, %v1697, %v1714
    %v1716 = vsel %vm1702, %v1713, %v1715
    %v1717 = vshll.u32 %v1677, 8
    %v1718 = vmul.u32.u64.compose %v1717, %v1716
    %v1719 = vextract.low.u32 %v1718
    %v1720 = vextract.high.u32 %v1718
    %v1721 = vmul.u32.u64.compose %v1717, %v1712
    %v1722 = vextract.low.u32 %v1721
    %v1723 = vextract.high.u32 %v1721
    %v1724 = vmul.u32 %v1717, %v1708
    %v1725 = vadd.s32 %v1720, %v1722
    %vm1726 = vc.u32 %v1720, %v1722
    %v1727 = vadd.s32 %v1723, 1
    %v1728 = vsel %vm1726, %v1727, %v1723
    %v1729 = vadd.s32 %v1724, %v1728
    %v1730 = vadd.s32 %v1729, 536870912
    %v1731 = vshrl.u32 %v1730, 30
    %v1732 = vshll.u32 %v1731, 30
    %v1733 = vsub.s32 %v1729, %v1732
    %vm1734 = vcmp.lt.s32.totalorder %v1733, 0
    %v1735 = vsub.s32 0, %v1733
    %v1736 = vsel %vm1734, %v1735, %v1733
    %v1737 = vclz %v1736
    %v1738 = vsub.s32 %v1737, 2
    %vm1739 = vcmp.gt.s32.totalorder 0, %v1738
    %v1740 = vsel %vm1739, 0, %v1738
    %v1741 = vsub.s32 32, %v1740
    %v1742 = vshll.u32 %v1733, %v1740
    %v1743 = vshrl.u32 %v1725, %v1741
    %v1744 = vor.u32 %v1742, %v1743
    %v1745 = vsub.s32 4294967266, %v1740
    %v1746 = vadd.s32 %v1745, 127
    %v1747 = vshll.u32 %v1746, 23
    %v1748 = vor.u32 4788187, %v1747
    %v1749 = vand.u32 2147483647, %v1748
    %v1751 = vcvt.s32.f32 %v1744
    %v1752 = vmul.f32 %v1751, %v1749
    %v1753 = vxor.u32 %v1752, 2147483648
    %v1754 = vsel %vm1671, %v1753, %v1752
    %v1755 = vsub.s32 4, %v1731
    %v1756 = vsel %vm1671, %v1755, %v1731
    %v1757 = vsel %vm1670, %v225, %v1754
    %v1758 = vsel %vm1670, 0, %v1756
    %v1759 = vcosq.f32.pop %v1757
    %v1760 = vsinq.f32.pop %v1757
    %vm1761 = vweird.f32 %v225
    %v1762 = vand.u32 %v1758, 3
    %vm1763 = vcmp.lt.s32.totalorder %v1762, 2
    %vm1764 = vcmp.eq.s32.totalorder %v1762, 0
    %v1765 = vxor.u32 %v1760, 2147483648
    %v1766 = vsel %vm1764, %v1759, %v1765
    %vm1767 = vcmp.eq.s32.totalorder %v1762, 2
    %v1768 = vxor.u32 %v1759, 2147483648
    %v1769 = vsel %vm1767, %v1768, %v1760
    %v1770 = vsel %vm1763, %v1766, %v1769
    %v1771 = vsel %vm1761, nan, %v1770
    %v1772 = vand.u32 2147483647, %v226
    %vm1773 = vcmp.le.f32.partialorder %v1772, 0.7853982
    %vm1774 = vcmp.lt.s32.totalorder %v226, 0
    %v1775 = vand.u32 %v226, 2139095040
    %v1776 = vshrl.u32 %v1775, 23
    %v1777 = vsub.s32 %v1776, 127
    %v1778 = vand.u32 2147483647, %v226
    %v1779 = vand.u32 %v1778, 8388607
    %v1780 = vor.u32 %v1779, 8388608
    %v1781 = vsub.s32 0, %v1780
    %v1782 = vadd.s32 %v1777, 1
    %vm1783 = vcmp.gt.s32.totalorder %v1782, 0
    %v1784 = vsel %vm1783, %v1782, 0
    %v1785 = vshrl.u32 %v1784, 5
    %v1786 = vand.u32 %v1784, 31
    %v1787 = vsub.s32 32, %v1786
    %v1788 = vshrl.u32 683565275, %v1787
    %v1789 = vshll.u32 683565275, %v1786
    %v1790 = vshrl.u32 2475754826, %v1787
    %v1791 = vor.u32 %v1789, %v1790
    %v1792 = vshll.u32 2475754826, %v1786
    %v1793 = vshrl.u32 2131351028, %v1787
    %v1794 = vor.u32 %v1792, %v1793
    %v1795 = vshll.u32 2131351028, %v1786
    %v1796 = vshrl.u32 2102212464, %v1787
    %v1797 = vor.u32 %v1795, %v1796
    %v1798 = vshll.u32 2102212464, %v1786
    %v1799 = vshrl.u32 920167782, %v1787
    %v1800 = vor.u32 %v1798, %v1799
    %v1801 = vshll.u32 920167782, %v1786
    %v1802 = vshrl.u32 1326507024, %v1787
    %v1803 = vor.u32 %v1801, %v1802
    %vm1804 = vcmp.lt.s32.totalorder %v1785, 1
    %vm1805 = vcmp.lt.s32.totalorder %v1785, 2
    %vm1806 = vcmp.lt.s32.totalorder %v1785, 3
    %vm1807 = vcmp.lt.s32.totalorder %v1785, 4
    %v1808 = vsel %vm1804, %v1788, %v1791
    %v1809 = vsel %vm1807, %v1797, 2102212464
    %v1810 = vsel %vm1806, %v1794, %v1809
    %v1811 = vsel %vm1805, %v1808, %v1810
    %v1812 = vsel %vm1804, %v1791, %v1794
    %v1813 = vsel %vm1807, %v1800, 920167782
    %v1814 = vsel %vm1806, %v1797, %v1813
    %v1815 = vsel %vm1805, %v1812, %v1814
    %v1816 = vsel %vm1804, %v1794, %v1797
    %v1817 = vsel %vm1807, %v1803, 1326507024
    %v1818 = vsel %vm1806, %v1800, %v1817
    %v1819 = vsel %vm1805, %v1816, %v1818
    %v1820 = vshll.u32 %v1780, 8
    %v1821 = vmul.u32.u64.compose %v1820, %v1819
    %v1822 = vextract.low.u32 %v1821
    %v1823 = vextract.high.u32 %v1821
    %v1824 = vmul.u32.u64.compose %v1820, %v1815
    %v1825 = vextract.low.u32 %v1824
    %v1826 = vextract.high.u32 %v1824
    %v1827 = vmul.u32 %v1820, %v1811
    %v1828 = vadd.s32 %v1823, %v1825
    %vm1829 = vc.u32 %v1823, %v1825
    %v1830 = vadd.s32 %v1826, 1
    %v1831 = vsel %vm1829, %v1830, %v1826
    %v1832 = vadd.s32 %v1827, %v1831
    %v1833 = vadd.s32 %v1832, 536870912
    %v1834 = vshrl.u32 %v1833, 30
    %v1835 = vshll.u32 %v1834, 30
    %v1836 = vsub.s32 %v1832, %v1835
    %vm1837 = vcmp.lt.s32.totalorder %v1836, 0
    %v1838 = vsub.s32 0, %v1836
    %v1839 = vsel %vm1837, %v1838, %v1836
    %v1840 = vclz %v1839
    %v1841 = vsub.s32 %v1840, 2
    %vm1842 = vcmp.gt.s32.totalorder 0, %v1841
    %v1843 = vsel %vm1842, 0, %v1841
    %v1844 = vsub.s32 32, %v1843
    %v1845 = vshll.u32 %v1836, %v1843
    %v1846 = vshrl.u32 %v1828, %v1844
    %v1847 = vor.u32 %v1845, %v1846
    %v1848 = vsub.s32 4294967266, %v1843
    %v1849 = vadd.s32 %v1848, 127
    %v1850 = vshll.u32 %v1849, 23
    %v1851 = vor.u32 4788187, %v1850
    %v1852 = vand.u32 2147483647, %v1851
    %v1854 = vcvt.s32.f32 %v1847
    %v1855 = vmul.f32 %v1854, %v1852
    %v1856 = vxor.u32 %v1855, 2147483648
    %v1857 = vsel %vm1774, %v1856, %v1855
    %v1858 = vsub.s32 4, %v1834
    %v1859 = vsel %vm1774, %v1858, %v1834
    %v1860 = vsel %vm1773, %v226, %v1857
    %v1861 = vsel %vm1773, 0, %v1859
    %v1862 = vcosq.f32.pop %v1860
    %v1863 = vsinq.f32.pop %v1860
    %vm1864 = vweird.f32 %v226
    %v1865 = vand.u32 %v1861, 3
    %vm1866 = vcmp.lt.s32.totalorder %v1865, 2
    %vm1867 = vcmp.eq.s32.totalorder %v1865, 0
    %v1868 = vxor.u32 %v1863, 2147483648
    %v1869 = vsel %vm1867, %v1862, %v1868
    %vm1870 = vcmp.eq.s32.totalorder %v1865, 2
    %v1871 = vxor.u32 %v1862, 2147483648
    %v1872 = vsel %vm1870, %v1871, %v1863
    %v1873 = vsel %vm1866, %v1869, %v1872
    %v1874 = vsel %vm1864, nan, %v1873
    %vm1875 = vcmp.lt.s32.totalorder %v114, 32
    %v1876 = vsel %vm1875, 1, 0
    %vm1877 = vcmp.eq.s32.totalorder %v1876, 1
    %v1878 = vsel %vm1877, %v329, 0.0
    %v1879 = vsel %vm1877, %v432, 0.0
    %v1880 = vsel %vm1877, %v535, 0.0
    %v1881 = vsel %vm1877, %v638, 0.0
    %v1882 = vsel %vm1877, %v741, 0.0
    %v1883 = vsel %vm1877, %v844, 0.0
    %v1884 = vsel %vm1877, %v947, 0.0
    %v1885 = vsel %vm1877, %v1050, 0.0
    %v1886 = vsel %vm1877, %v1153, 0.0
    %v1887 = vsel %vm1877, %v1256, 0.0
    %v1888 = vsel %vm1877, %v1359, 0.0
    %v1889 = vsel %vm1877, %v1462, 0.0
    %v1890 = vsel %vm1877, %v1565, 0.0
    %v1891 = vsel %vm1877, %v1668, 0.0
    %v1892 = vsel %vm1877, %v1771, 0.0
    %v1893 = vsel %vm1877, %v1874, 0.0
    %v1894 = vld [vmem:[#allocation4] sm:$0x1]
    %vm1895 = vcmask 57344
    %v1896 = vsel %vm1895, %v1894, 0.0
    %1897 = vadd.xlane.f32.xlu0 %v1896
    %v1898 = vpop.xlane.xlu0 %1897
    %v1899 = vmax.f32 %v1898, 1.0
    %v1900 = vsub.f32 8.0, %v1898
    %v1901 = vmax.f32 %v1900, 1.0
    %v1902 = vrcp.pop %v1899
    %v1903 = vmul.f32 1.0, %v1902
    %v1904 = vmul.f32 %v1894, %v1903
    %v1905 = vsub.f32 1.0, %v1894
    %v1906 = vrcp.pop %v1901
    %v1907 = vmul.f32 1.0, %v1906
    %v1908 = vmul.f32 %v1905, %v1907
    %vm1909 = vcmp.eq.s32.totalorder %v97, 0
    %vm1910 = vcmp.eq.s32.totalorder %v97, 3
    %vm1911 = vmor %vm1909, %vm1910
    %vm1912 = vcmp.eq.s32.totalorder %v97, 4
    %vm1913 = vmor %vm1911, %vm1912
    %vm1914 = vcmp.eq.s32.totalorder %v97, 7
    %vm1915 = vmor %vm1913, %vm1914
    %v1916 = vsel %vm1915, 1, 0
    %vm1917 = vcmp.eq.s32.totalorder %v1916, 1
    %v1919 = vlaneseq
    %v1920 = vshrl.u32 %v1919, 7
    %v1921 = vsub.s32 0, %v1920
    %v1922 = vrot.slane %v1904, %v1921
    %v1925 = vlaneseq
    %v1926 = vshrl.u32 %v1925, 7
    %v1927 = vsub.s32 0, %v1926
    %v1928 = vrot.slane %v1908, %v1927
    %v1930 = vsel %vm1917, %v1922, %v1928
    %vm1931 = vcmp.lt.s32.totalorder %v97, 4
    %v1932 = vsel %vm1931, 1.0, 1.998
    %v1933 = vsel %vm1931, 0.0, 0.999
    %v1934 = vmul.f32 %v1930, %v1932
    %v1935 = vld [vmem:[#allocation8] sm:$0xff]
    %v1936 = vmul.f32 %v1930, %v1933
    %v1937 = vld [vmem:[#allocation10] sm:$0xff]
    %vm1938 = vcmask 64512
    %v1940 = vsel %vm1938, %v1936, 0
    %1942 = vmatprep.subr.mxu0 0.0
    %1943 = vmatpush1.msra.mxu0 %v1937
    %1944 = vmatprep.subr.mxu0 0.0
    %1945 = vmatpush1.msra.mxu0 0.0
    %1946 = vmatprep.subr.mxu0 0.0
    %1947 = vmatpush1.msra.mxu0 0.0
    %1948 = vmatprep.subr.mxu0 0.0
    %1949 = vmatpush1.msra.mxu0 0.0
    %1950 = vmatprep.subr.mxu0 0.0
    %1951 = vmatpush1.msra.mxu0 0.0
    %1952 = vmatprep.subr.mxu0 0.0
    %1953 = vmatpush1.msra.mxu0 0.0
    %1954 = vmatprep.subr.mxu0 0.0
    %1955 = vmatpush1.msra.mxu0 0.0
    %1956 = vmatprep.subr.mxu0 0.0
    %1957 = vmatpush1.msra.mxu0 0.0
    %1958 = vmatprep.subr.mxu0 0.0
    %1959 = vmatpush1.msra.mxu0 0.0
    %1960 = vmatprep.subr.mxu0 0.0
    %1961 = vmatpush1.msra.mxu0 0.0
    %1962 = vmatprep.subr.mxu0 0.0
    %1963 = vmatpush1.msra.mxu0 0.0
    %1964 = vmatprep.subr.mxu0 0.0
    %1965 = vmatpush1.msra.mxu0 0.0
    %1966 = vmatprep.subr.mxu0 0.0
    %1967 = vmatpush1.msra.mxu0 0.0
    %1968 = vmatprep.subr.mxu0 0.0
    %1969 = vmatpush1.msra.mxu0 0.0
    %1970 = vmatprep.subr.mxu0 0.0
    %1971 = vmatpush1.msra.mxu0 0.0
    %1972 = vmatprep.subr.mxu0 0.0
    %1973 = vmatpush1.msra.mxu0 0.0
    %1974 = vmatprep.subr.mxu0 0.0
    %1975 = vmatpush1.msra.mxu0 0.0
    %1976 = vmatprep.subr.mxu0 0.0
    %1977 = vmatpush1.msra.mxu0 0.0
    %1978 = vmatprep.subr.mxu0 0.0
    %1979 = vmatpush1.msra.mxu0 0.0
    %1980 = vmatprep.subr.mxu0 0.0
    %1981 = vmatpush1.msra.mxu0 0.0
    %1982 = vmatprep.subr.mxu0 0.0
    %1983 = vmatpush1.msra.mxu0 0.0
    %1984 = vmatprep.subr.mxu0 0.0
    %1985 = vmatpush1.msra.mxu0 0.0
    %1986 = vmatprep.subr.mxu0 0.0
    %1987 = vmatpush1.msra.mxu0 0.0
    %1988 = vmatprep.subr.mxu0 0.0
    %1989 = vmatpush1.msra.mxu0 0.0
    %1990 = vmatprep.subr.mxu0 0.0
    %1991 = vmatpush1.msra.mxu0 0.0
    %1992 = vmatprep.subr.mxu0 0.0
    %1993 = vmatpush1.msra.mxu0 0.0
    %1994 = vmatprep.subr.mxu0 0.0
    %1995 = vmatpush1.msra.mxu0 0.0
    %1996 = vmatprep.subr.mxu0 0.0
    %1997 = vmatpush1.msra.mxu0 0.0
    %1998 = vmatprep.subr.mxu0 0.0
    %1999 = vmatpush1.msra.mxu0 0.0
    %2000 = vmatprep.subr.mxu0 0.0
    %2001 = vmatpush1.msra.mxu0 0.0
    %2002 = vmatprep.subr.mxu0 0.0
    %2003 = vmatpush1.msra.mxu0 0.0
    %2004 = vmatprep.subr.mxu0 0.0
    %2005 = vmatpush1.msra.mxu0 0.0
    %2006 = vmatprep.mubr.f32.mxu0 0.0
    %2007 = vmatmul.mubr.f32.gmra.mrb[0].mxu0 %v1940
    %v2008 = vpop.f32.mrb[0].mxu0
    %v2009 = vadd.f32 0.0, %v2008
    %v2010 = vpop.f32.mrb[0].mxu0
    %2011 = vdwg.mxu0
    %v2013 = vsel %vm1938, %v1934, 0
    %2015 = vmatprep.subr.mxu0 0.0
    %2016 = vmatpush1.msra.mxu0 %v1935
    %2017 = vmatprep.subr.mxu0 0.0
    %2018 = vmatpush1.msra.mxu0 0.0
    %2019 = vmatprep.subr.mxu0 0.0
    %2020 = vmatpush1.msra.mxu0 0.0
    %2021 = vmatprep.subr.mxu0 0.0
    %2022 = vmatpush1.msra.mxu0 0.0
    %2023 = vmatprep.subr.mxu0 0.0
    %2024 = vmatpush1.msra.mxu0 0.0
    %2025 = vmatprep.subr.mxu0 0.0
    %2026 = vmatpush1.msra.mxu0 0.0
    %2027 = vmatprep.subr.mxu0 0.0
    %2028 = vmatpush1.msra.mxu0 0.0
    %2029 = vmatprep.subr.mxu0 0.0
    %2030 = vmatpush1.msra.mxu0 0.0
    %2031 = vmatprep.subr.mxu0 0.0
    %2032 = vmatpush1.msra.mxu0 0.0
    %2033 = vmatprep.subr.mxu0 0.0
    %2034 = vmatpush1.msra.mxu0 0.0
    %2035 = vmatprep.subr.mxu0 0.0
    %2036 = vmatpush1.msra.mxu0 0.0
    %2037 = vmatprep.subr.mxu0 0.0
    %2038 = vmatpush1.msra.mxu0 0.0
    %2039 = vmatprep.subr.mxu0 0.0
    %2040 = vmatpush1.msra.mxu0 0.0
    %2041 = vmatprep.subr.mxu0 0.0
    %2042 = vmatpush1.msra.mxu0 0.0
    %2043 = vmatprep.subr.mxu0 0.0
    %2044 = vmatpush1.msra.mxu0 0.0
    %2045 = vmatprep.subr.mxu0 0.0
    %2046 = vmatpush1.msra.mxu0 0.0
    %2047 = vmatprep.subr.mxu0 0.0
    %2048 = vmatpush1.msra.mxu0 0.0
    %2049 = vmatprep.subr.mxu0 0.0
    %2050 = vmatpush1.msra.mxu0 0.0
    %2051 = vmatprep.subr.mxu0 0.0
    %2052 = vmatpush1.msra.mxu0 0.0
    %2053 = vmatprep.subr.mxu0 0.0
    %2054 = vmatpush1.msra.mxu0 0.0
    %2055 = vmatprep.subr.mxu0 0.0
    %2056 = vmatpush1.msra.mxu0 0.0
    %2057 = vmatprep.subr.mxu0 0.0
    %2058 = vmatpush1.msra.mxu0 0.0
    %2059 = vmatprep.subr.mxu0 0.0
    %2060 = vmatpush1.msra.mxu0 0.0
    %2061 = vmatprep.subr.mxu0 0.0
    %2062 = vmatpush1.msra.mxu0 0.0
    %2063 = vmatprep.subr.mxu0 0.0
    %2064 = vmatpush1.msra.mxu0 0.0
    %2065 = vmatprep.subr.mxu0 0.0
    %2066 = vmatpush1.msra.mxu0 0.0
    %2067 = vmatprep.subr.mxu0 0.0
    %2068 = vmatpush1.msra.mxu0 0.0
    %2069 = vmatprep.subr.mxu0 0.0
    %2070 = vmatpush1.msra.mxu0 0.0
    %2071 = vmatprep.subr.mxu0 0.0
    %2072 = vmatpush1.msra.mxu0 0.0
    %2073 = vmatprep.subr.mxu0 0.0
    %2074 = vmatpush1.msra.mxu0 0.0
    %2075 = vmatprep.subr.mxu0 0.0
    %2076 = vmatpush1.msra.mxu0 0.0
    %2077 = vmatprep.subr.mxu0 0.0
    %2078 = vmatpush1.msra.mxu0 0.0
    %2079 = vmatprep.mubr.f32.mxu0 0.0
    %2080 = vmatmul.mubr.f32.gmra.mrb[0].mxu0 %v2013
    %v2081 = vpop.f32.mrb[0].mxu0
    %v2082 = vadd.f32 %v2009, %v2081
    %v2083 = vpop.f32.mrb[0].mxu0
    %2084 = vdwg.mxu0
    %2085 = vmatprep.subr.mxu0 0.0
    %2086 = vmatpush1.msra.mxu0 %v1878
    %2087 = vmatprep.subr.mxu0 0.0
    %2088 = vmatpush1.msra.mxu0 %v1879
    %2089 = vmatprep.subr.mxu0 0.0
    %2090 = vmatpush1.msra.mxu0 %v1880
    %2091 = vmatprep.subr.mxu0 0.0
    %2092 = vmatpush1.msra.mxu0 %v1881
    %2093 = vmatprep.subr.mxu0 0.0
    %2094 = vmatpush1.msra.mxu0 %v1882
    %2095 = vmatprep.subr.mxu0 0.0
    %2096 = vmatpush1.msra.mxu0 %v1883
    %2097 = vmatprep.subr.mxu0 0.0
    %2098 = vmatpush1.msra.mxu0 %v1884
    %2099 = vmatprep.subr.mxu0 0.0
    %2100 = vmatpush1.msra.mxu0 %v1885
    %2101 = vmatprep.subr.mxu0 0.0
    %2102 = vmatpush1.msra.mxu0 %v1886
    %2103 = vmatprep.subr.mxu0 0.0
    %2104 = vmatpush1.msra.mxu0 %v1887
    %2105 = vmatprep.subr.mxu0 0.0
    %2106 = vmatpush1.msra.mxu0 %v1888
    %2107 = vmatprep.subr.mxu0 0.0
    %2108 = vmatpush1.msra.mxu0 %v1889
    %2109 = vmatprep.subr.mxu0 0.0
    %2110 = vmatpush1.msra.mxu0 %v1890
    %2111 = vmatprep.subr.mxu0 0.0
    %2112 = vmatpush1.msra.mxu0 %v1891
    %2113 = vmatprep.subr.mxu0 0.0
    %2114 = vmatpush1.msra.mxu0 %v1892
    %2115 = vmatprep.subr.mxu0 0.0
    %2116 = vmatpush1.msra.mxu0 %v1893
    %2117 = vmatprep.subr.mxu0 0.0
    %2118 = vmatpush1.msra.mxu0 0.0
    %2119 = vmatprep.subr.mxu0 0.0
    %2120 = vmatpush1.msra.mxu0 0.0
    %2121 = vmatprep.subr.mxu0 0.0
    %2122 = vmatpush1.msra.mxu0 0.0
    %2123 = vmatprep.subr.mxu0 0.0
    %2124 = vmatpush1.msra.mxu0 0.0
    %2125 = vmatprep.subr.mxu0 0.0
    %2126 = vmatpush1.msra.mxu0 0.0
    %2127 = vmatprep.subr.mxu0 0.0
    %2128 = vmatpush1.msra.mxu0 0.0
    %2129 = vmatprep.subr.mxu0 0.0
    %2130 = vmatpush1.msra.mxu0 0.0
    %2131 = vmatprep.subr.mxu0 0.0
    %2132 = vmatpush1.msra.mxu0 0.0
    %2133 = vmatprep.subr.mxu0 0.0
    %2134 = vmatpush1.msra.mxu0 0.0
    %2135 = vmatprep.subr.mxu0 0.0
    %2136 = vmatpush1.msra.mxu0 0.0
    %2137 = vmatprep.subr.mxu0 0.0
    %2138 = vmatpush1.msra.mxu0 0.0
    %2139 = vmatprep.subr.mxu0 0.0
    %2140 = vmatpush1.msra.mxu0 0.0
    %2141 = vmatprep.subr.mxu0 0.0
    %2142 = vmatpush1.msra.mxu0 0.0
    %2143 = vmatprep.subr.mxu0 0.0
    %2144 = vmatpush1.msra.mxu0 0.0
    %2145 = vmatprep.subr.mxu0 0.0
    %2146 = vmatpush1.msra.mxu0 0.0
    %2147 = vmatprep.subr.mxu0 0.0
    %2148 = vmatpush1.msra.mxu0 0.0
    %2149 = vmatprep.mubr.f32.mxu0 0.0
    %2150 = vmatmul.mubr.f32.gmra.mrb[0].mxu0 %v2082
    %v2151 = vpop.f32.mrb[0].mxu0
    %v2152 = vadd.f32 0.0, %v2151
    %v2153 = vpop.f32.mrb[0].mxu0
    %2154 = vdwg.mxu0
    %v2155 = vmul.f32 %v1898, %v2152
    %v2157 = vrot.slane %v2152, 1
    %v2159 = vmul.f32 %v1900, %v2157
    %v2160 = vadd.f32 %v2155, %v2159
    %v2161 = vmul.f32 %v2160, 0.125
    %vm2162 = vcmp.lt.s32.totalorder %v97, 2
    %v2163 = vsel %vm2162, 1, 0
    %vm2164 = vcmp.eq.s32.totalorder %v2163, 1
    %v2165 = vsub.f32 1.0, %v2161
    %v2166 = vlaneseq
    %v2167 = vshrl.u32 %v2166, 7
    %v2168 = vsub.s32 0, %v2167
    %v2169 = vrot.slane %v2165, %v2168
    %v2170 = vlaneseq
    %v2171 = vshrl.u32 %v2170, 7
    %v2172 = vsub.s32 0, %v2171
    %v2173 = vrot.slane %v2161, %v2172
    %v2174 = vsel %vm2164, %v2169, %v2173
    %v2175 = vmul.f32 %v2152, %v2174
    %2176 = vmatprep.subr.mxu0 0.0
    %2177 = vmatpush1.msra.mxu0 %v1878
    %2178 = vmatprep.subr.mxu0 0.0
    %2179 = vmatpush1.msra.mxu0 %v1879
    %2180 = vmatprep.subr.mxu0 0.0
    %2181 = vmatpush1.msra.mxu0 %v1880
    %2182 = vmatprep.subr.mxu0 0.0
    %2183 = vmatpush1.msra.mxu0 %v1881
    %2184 = vmatprep.subr.mxu0 0.0
    %2185 = vmatpush1.msra.mxu0 %v1882
    %2186 = vmatprep.subr.mxu0 0.0
    %2187 = vmatpush1.msra.mxu0 %v1883
    %2188 = vmatprep.subr.mxu0 0.0
    %2189 = vmatpush1.msra.mxu0 %v1884
    %2190 = vmatprep.subr.mxu0 0.0
    %2191 = vmatpush1.msra.mxu0 %v1885
    %2192 = vmatprep.subr.mxu0 0.0
    %2193 = vmatpush1.msra.mxu0 %v1886
    %2194 = vmatprep.subr.mxu0 0.0
    %2195 = vmatpush1.msra.mxu0 %v1887
    %2196 = vmatprep.subr.mxu0 0.0
    %2197 = vmatpush1.msra.mxu0 %v1888
    %2198 = vmatprep.subr.mxu0 0.0
    %2199 = vmatpush1.msra.mxu0 %v1889
    %2200 = vmatprep.subr.mxu0 0.0
    %2201 = vmatpush1.msra.mxu0 %v1890
    %2202 = vmatprep.subr.mxu0 0.0
    %2203 = vmatpush1.msra.mxu0 %v1891
    %2204 = vmatprep.subr.mxu0 0.0
    %2205 = vmatpush1.msra.mxu0 %v1892
    %2206 = vmatprep.subr.mxu0 0.0
    %2207 = vmatpush1.msra.mxu0 %v1893
    %2208 = vmatprep.subr.mxu0 0.0
    %2209 = vmatpush1.msra.mxu0 0.0
    %2210 = vmatprep.subr.mxu0 0.0
    %2211 = vmatpush1.msra.mxu0 0.0
    %2212 = vmatprep.subr.mxu0 0.0
    %2213 = vmatpush1.msra.mxu0 0.0
    %2214 = vmatprep.subr.mxu0 0.0
    %2215 = vmatpush1.msra.mxu0 0.0
    %2216 = vmatprep.subr.mxu0 0.0
    %2217 = vmatpush1.msra.mxu0 0.0
    %2218 = vmatprep.subr.mxu0 0.0
    %2219 = vmatpush1.msra.mxu0 0.0
    %2220 = vmatprep.subr.mxu0 0.0
    %2221 = vmatpush1.msra.mxu0 0.0
    %2222 = vmatprep.subr.mxu0 0.0
    %2223 = vmatpush1.msra.mxu0 0.0
    %2224 = vmatprep.subr.mxu0 0.0
    %2225 = vmatpush1.msra.mxu0 0.0
    %2226 = vmatprep.subr.mxu0 0.0
    %2227 = vmatpush1.msra.mxu0 0.0
    %2228 = vmatprep.subr.mxu0 0.0
    %2229 = vmatpush1.msra.mxu0 0.0
    %2230 = vmatprep.subr.mxu0 0.0
    %2231 = vmatpush1.msra.mxu0 0.0
    %2232 = vmatprep.subr.mxu0 0.0
    %2233 = vmatpush1.msra.mxu0 0.0
    %2234 = vmatprep.subr.mxu0 0.0
    %2235 = vmatpush1.msra.mxu0 0.0
    %2236 = vmatprep.subr.mxu0 0.0
    %2237 = vmatpush1.msra.mxu0 0.0
    %2238 = vmatprep.subr.mxu0 0.0
    %2239 = vmatpush1.msra.mxu0 0.0
    %2240 = vmatprep.mubr.f32.mxu0 0.0
    %2241 = vmatmul.mubr.f32.gmra.mrb[0].mxu0 %v2175
    %v2242 = vpop.f32.mrb[0].mxu0
    %v2243 = vadd.f32 0.0, %v2242
    %v2244 = vpop.f32.mrb[0].mxu0
    %2245 = vdwg.mxu0
    %v2246 = vmul.f32 %v2243, 0.03125
    %v2247 = vmul.f32 %v2246, 0.003
    %v2248 = vrot.slane %v2152, 4
    %v2250 = vadd.f32 %v2247, %v2248
    %s2251 = smul.u32 8, 16
    %s2252 = smul.u32 %s2251, 2
    %s2253 = sshll.u32 %s2252, 4
    %2254 = dma.done [#allocation3], %s2253
    %v2255 = vld [vmem:[#allocation8] sm:$0xff]
    %v2256 = vld [vmem:[#allocation2] sm:$0xff]
    %v2257 = vld [vmem:[#allocation2 + $0x8] sm:$0xff]
    %v2258 = vld [vmem:[#allocation2 + $0x10] sm:$0xff]
    %v2259 = vld [vmem:[#allocation2 + $0x18] sm:$0xff]
    %v2260 = vld [vmem:[#allocation2 + $0x20] sm:$0xff]
    %v2261 = vld [vmem:[#allocation2 + $0x28] sm:$0xff]
    %v2262 = vld [vmem:[#allocation2 + $0x30] sm:$0xff]
    %v2263 = vld [vmem:[#allocation2 + $0x38] sm:$0xff]
    %v2264 = vld [vmem:[#allocation2 + $0x40] sm:$0xff]
    %v2265 = vld [vmem:[#allocation2 + $0x48] sm:$0xff]
    %v2266 = vld [vmem:[#allocation2 + $0x50] sm:$0xff]
    %v2267 = vld [vmem:[#allocation2 + $0x58] sm:$0xff]
    %v2268 = vld [vmem:[#allocation2 + $0x60] sm:$0xff]
    %v2269 = vld [vmem:[#allocation2 + $0x68] sm:$0xff]
    %v2270 = vld [vmem:[#allocation2 + $0x70] sm:$0xff]
    %v2271 = vld [vmem:[#allocation2 + $0x78] sm:$0xff]
    %v2272 = vld [vmem:[#allocation2 + $0x80] sm:$0xff]
    %v2273 = vld [vmem:[#allocation2 + $0x88] sm:$0xff]
    %v2274 = vld [vmem:[#allocation2 + $0x90] sm:$0xff]
    %v2275 = vld [vmem:[#allocation2 + $0x98] sm:$0xff]
    %v2276 = vld [vmem:[#allocation2 + $0xa0] sm:$0xff]
    %v2277 = vld [vmem:[#allocation2 + $0xa8] sm:$0xff]
    %v2278 = vld [vmem:[#allocation2 + $0xb0] sm:$0xff]
    %v2279 = vld [vmem:[#allocation2 + $0xb8] sm:$0xff]
    %v2280 = vld [vmem:[#allocation2 + $0xc0] sm:$0xff]
    %v2281 = vld [vmem:[#allocation2 + $0xc8] sm:$0xff]
    %v2282 = vld [vmem:[#allocation2 + $0xd0] sm:$0xff]
    %v2283 = vld [vmem:[#allocation2 + $0xd8] sm:$0xff]
    %v2284 = vld [vmem:[#allocation2 + $0xe0] sm:$0xff]
    %v2285 = vld [vmem:[#allocation2 + $0xe8] sm:$0xff]
    %v2286 = vld [vmem:[#allocation2 + $0xf0] sm:$0xff]
    %v2287 = vld [vmem:[#allocation2 + $0xf8] sm:$0xff]
    %2288 = vmatprep.subr.mxu0 %v2257
    %2289 = vmatpush1.msra.mxu0 %v2256
    %2290 = vmatprep.subr.mxu0 %v2259
    %2291 = vmatpush1.msra.mxu0 %v2258
    %2292 = vmatprep.subr.mxu0 %v2261
    %2293 = vmatpush1.msra.mxu0 %v2260
    %2294 = vmatprep.subr.mxu0 %v2263
    %2295 = vmatpush1.msra.mxu0 %v2262
    %2296 = vmatprep.subr.mxu0 %v2265
    %2297 = vmatpush1.msra.mxu0 %v2264
    %2298 = vmatprep.subr.mxu0 %v2267
    %2299 = vmatpush1.msra.mxu0 %v2266
    %2300 = vmatprep.subr.mxu0 %v2269
    %2301 = vmatpush1.msra.mxu0 %v2268
    %2302 = vmatprep.subr.mxu0 %v2271
    %2303 = vmatpush1.msra.mxu0 %v2270
    %2304 = vmatprep.subr.mxu0 %v2273
    %2305 = vmatpush1.msra.mxu0 %v2272
    %2306 = vmatprep.subr.mxu0 %v2275
    %2307 = vmatpush1.msra.mxu0 %v2274
    %2308 = vmatprep.subr.mxu0 %v2277
    %2309 = vmatpush1.msra.mxu0 %v2276
    %2310 = vmatprep.subr.mxu0 %v2279
    %2311 = vmatpush1.msra.mxu0 %v2278
    %2312 = vmatprep.subr.mxu0 %v2281
    %2313 = vmatpush1.msra.mxu0 %v2280
    %2314 = vmatprep.subr.mxu0 %v2283
    %2315 = vmatpush1.msra.mxu0 %v2282
    %2316 = vmatprep.subr.mxu0 %v2285
    %2317 = vmatpush1.msra.mxu0 %v2284
    %2318 = vmatprep.subr.mxu0 %v2287
    %2319 = vmatpush1.msra.mxu0 %v2286
    %2320 = vmatprep.subr.mxu0 0.0
    %2321 = vmatpush1.msra.mxu0 0.0
    %2322 = vmatprep.subr.mxu0 0.0
    %2323 = vmatpush1.msra.mxu0 0.0
    %2324 = vmatprep.subr.mxu0 0.0
    %2325 = vmatpush1.msra.mxu0 0.0
    %2326 = vmatprep.subr.mxu0 0.0
    %2327 = vmatpush1.msra.mxu0 0.0
    %2328 = vmatprep.subr.mxu0 0.0
    %2329 = vmatpush1.msra.mxu0 0.0
    %2330 = vmatprep.subr.mxu0 0.0
    %2331 = vmatpush1.msra.mxu0 0.0
    %2332 = vmatprep.subr.mxu0 0.0
    %2333 = vmatpush1.msra.mxu0 0.0
    %2334 = vmatprep.subr.mxu0 0.0
    %2335 = vmatpush1.msra.mxu0 0.0
    %2336 = vmatprep.subr.mxu0 0.0
    %2337 = vmatpush1.msra.mxu0 0.0
    %2338 = vmatprep.subr.mxu0 0.0
    %2339 = vmatpush1.msra.mxu0 0.0
    %2340 = vmatprep.subr.mxu0 0.0
    %2341 = vmatpush1.msra.mxu0 0.0
    %2342 = vmatprep.subr.mxu0 0.0
    %2343 = vmatpush1.msra.mxu0 0.0
    %2344 = vmatprep.subr.mxu0 0.0
    %2345 = vmatpush1.msra.mxu0 0.0
    %2346 = vmatprep.subr.mxu0 0.0
    %2347 = vmatpush1.msra.mxu0 0.0
    %2348 = vmatprep.subr.mxu0 0.0
    %2349 = vmatpush1.msra.mxu0 0.0
    %2350 = vmatprep.subr.mxu0 0.0
    %2351 = vmatpush1.msra.mxu0 0.0
    %2352 = vmatprep.mubr.f32.mxu0 0.0
    %2353 = vmatmul.mubr.f32.gmra.mrb[0].mxu0 %v2255
    %v2354 = vpop.f32.mrb[0].mxu0
    %v2355 = vadd.f32 0.0, %v2354
    %v2356 = vpop.f32.mrb[0].mxu0
    %v2357 = vadd.f32 0.0, %v2356
    %2358 = vdwg.mxu0
    %2359 = vmatprep.subr.mxu0 0.0
    %2360 = vmatpush1.xpose.msra.mxu0 %v2355
    %2361 = vmatprep.subr.mxu0 0.0
    %2362 = vmatpush1.xpose.msra.mxu0 0.0
    %2363 = vmatprep.subr.mxu0 0.0
    %2364 = vmatpush1.xpose.msra.mxu0 0.0
    %2365 = vmatprep.subr.mxu0 0.0
    %2366 = vmatpush1.xpose.msra.mxu0 0.0
    %2367 = vmatprep.subr.mxu0 0.0
    %2368 = vmatpush1.xpose.msra.mxu0 0.0
    %2369 = vmatprep.subr.mxu0 0.0
    %2370 = vmatpush1.xpose.msra.mxu0 0.0
    %2371 = vmatprep.subr.mxu0 0.0
    %2372 = vmatpush1.xpose.msra.mxu0 0.0
    %2373 = vmatprep.subr.mxu0 0.0
    %2374 = vmatpush1.xpose.msra.mxu0 0.0
    %2375 = vmatprep.subr.mxu0 0.0
    %2376 = vmatpush1.xpose.msra.mxu0 0.0
    %2377 = vmatprep.subr.mxu0 0.0
    %2378 = vmatpush1.xpose.msra.mxu0 0.0
    %2379 = vmatprep.subr.mxu0 0.0
    %2380 = vmatpush1.xpose.msra.mxu0 0.0
    %2381 = vmatprep.subr.mxu0 0.0
    %2382 = vmatpush1.xpose.msra.mxu0 0.0
    %2383 = vmatprep.subr.mxu0 0.0
    %2384 = vmatpush1.xpose.msra.mxu0 0.0
    %2385 = vmatprep.subr.mxu0 0.0
    %2386 = vmatpush1.xpose.msra.mxu0 0.0
    %2387 = vmatprep.subr.mxu0 0.0
    %2388 = vmatpush1.xpose.msra.mxu0 0.0
    %2389 = vmatprep.subr.mxu0 0.0
    %2390 = vmatpush1.xpose.msra.mxu0 0.0
    %2391 = vmatprep.subr.mxu0 0.0
    %2392 = vmatpush1.xpose.msra.mxu0 0.0
    %2393 = vmatprep.subr.mxu0 0.0
    %2394 = vmatpush1.xpose.msra.mxu0 0.0
    %2395 = vmatprep.subr.mxu0 0.0
    %2396 = vmatpush1.xpose.msra.mxu0 0.0
    %2397 = vmatprep.subr.mxu0 0.0
    %2398 = vmatpush1.xpose.msra.mxu0 0.0
    %2399 = vmatprep.subr.mxu0 0.0
    %2400 = vmatpush1.xpose.msra.mxu0 0.0
    %2401 = vmatprep.subr.mxu0 0.0
    %2402 = vmatpush1.xpose.msra.mxu0 0.0
    %2403 = vmatprep.subr.mxu0 0.0
    %2404 = vmatpush1.xpose.msra.mxu0 0.0
    %2405 = vmatprep.subr.mxu0 0.0
    %2406 = vmatpush1.xpose.msra.mxu0 0.0
    %2407 = vmatprep.subr.mxu0 0.0
    %2408 = vmatpush1.xpose.msra.mxu0 0.0
    %2409 = vmatprep.subr.mxu0 0.0
    %2410 = vmatpush1.xpose.msra.mxu0 0.0
    %2411 = vmatprep.subr.mxu0 0.0
    %2412 = vmatpush1.xpose.msra.mxu0 0.0
    %2413 = vmatprep.subr.mxu0 0.0
    %2414 = vmatpush1.xpose.msra.mxu0 0.0
    %2415 = vmatprep.subr.mxu0 0.0
    %2416 = vmatpush1.xpose.msra.mxu0 0.0
    %2417 = vmatprep.subr.mxu0 0.0
    %2418 = vmatpush1.xpose.msra.mxu0 0.0
    %2419 = vmatprep.subr.mxu0 0.0
    %2420 = vmatpush1.xpose.msra.mxu0 0.0
    %2421 = vmatprep.subr.mxu0 0.0
    %2422 = vmatpush1.xpose.msra.mxu0 0.0
    %2423 = vmatprep.mubr.f32.mxu0 0.0
    %2424 = vmatmul.mubr.f32.gmra.mrb[0].mxu0 %v2250
    %v2425 = vpop.f32.mrb[0].mxu0
    %v2426 = vadd.f32 0.0, %v2425
    %v2427 = vpop.f32.mrb[0].mxu0
    %2428 = vdwg.mxu0
    %v2429 = vld [vmem:[%s3] sm:$0xff]
    %v2430 = vmul.f32 %v2429, 2.0
    %v2431 = vld [vmem:[#allocation11] sm:$0xff]
    %v2432 = vadd.f32 %v2430, %v2431
    %v2433 = vmul.f32 %v2432, 0.33333334
    %v2434 = vmul.f32 %v2433, %v2357
    %vm2435 = vcmp.gt.f32.partialorder %v1894, 0.5
    %s2436 = sld [smem:[#allocation13]]
    %s2437 = smul.f32 %s2436, 3.0
    %s2438 = sld [smem:[#allocation13 + $0x1]]
    %vm2439 = vcmask 1040576
    %2440 = vst.msk [vmem:[#allocation14] sm:$0x1] %vm2439, 0.0
    %v2443 = vunpack.c.l.s4 1966171168
    %v2444 = vunpack.c.0.s8 %v2443
    %v2445 = vlaneseq
    %v2446 = vshrl.u32 %v2445, 7
    %v2447 = vsub.s32 %v2444, %v2446
    %v2448 = vrot.slane %v2426, %v2447
    %v2449 = vcombine.high %v2448, %v2448
    %v2451 = vunpack.c.l.s4 1966171168
    %v2452 = vunpack.c.0.s8 %v2451
    %v2453 = vlaneseq
    %v2454 = vshrl.u32 %v2453, 7
    %v2455 = vsub.s32 %v2452, %v2454
    %v2456 = vrot.slane %v2448, %v2455
    %v2458 = vunpack.c.l.s4 1966171168
    %v2459 = vunpack.c.0.s8 %v2458
    %v2460 = vlaneseq
    %v2461 = vshrl.u32 %v2460, 7
    %v2462 = vsub.s32 %v2459, %v2461
    %v2463 = vrot.slane %v2449, %v2462
    %v2465 = vsel %vm2435, %v2426, %v2463
    %v2466 = vstv %s2437
    %v2467 = vadd.f32 %v2465, %v2466
    %2468 = vst.msk [vmem:[#allocation14] sm:$0x1] %vm1895, %v2467
    %v2469 = vcombine.high %v2456, %v2456
    %v2471 = vcombine.high %v2463, %v2463
    %v2473 = vsel %vm2435, %v2469, %v2471
    %v2474 = vadd.f32 %v2473, %v2466
    %v2476 = vlaneseq
    %v2477 = vshrl.u32 %v2476, 7
    %v2478 = vsub.s32 0, %v2477
    %v2479 = vrot.slane %v2474, %v2478
    %2480 = vrot.lane.b32.xlu0 %v2479, 8
    %v2481 = vpop.permute.xlu0 %2480
    %vm2483 = vcmask 122944
    %2484 = vst.msk [vmem:[#allocation14] sm:$0x1] %vm2483, %v2481
    %v2485 = vstv %s2438
    %2486 = vmatprep.subr.mxu0 0.0
    %2487 = vmatpush1.xpose.msra.mxu0 %v2434
    %2488 = vmatprep.subr.mxu0 0.0
    %2489 = vmatpush1.xpose.msra.mxu0 0.0
    %2490 = vmatprep.subr.mxu0 0.0
    %2491 = vmatpush1.xpose.msra.mxu0 0.0
    %2492 = vmatprep.subr.mxu0 0.0
    %2493 = vmatpush1.xpose.msra.mxu0 0.0
    %2494 = vmatprep.subr.mxu0 0.0
    %2495 = vmatpush1.xpose.msra.mxu0 0.0
    %2496 = vmatprep.subr.mxu0 0.0
    %2497 = vmatpush1.xpose.msra.mxu0 0.0
    %2498 = vmatprep.subr.mxu0 0.0
    %2499 = vmatpush1.xpose.msra.mxu0 0.0
    %2500 = vmatprep.subr.mxu0 0.0
    %2501 = vmatpush1.xpose.msra.mxu0 0.0
    %2502 = vmatprep.subr.mxu0 0.0
    %2503 = vmatpush1.xpose.msra.mxu0 0.0
    %2504 = vmatprep.subr.mxu0 0.0
    %2505 = vmatpush1.xpose.msra.mxu0 0.0
    %2506 = vmatprep.subr.mxu0 0.0
    %2507 = vmatpush1.xpose.msra.mxu0 0.0
    %2508 = vmatprep.subr.mxu0 0.0
    %2509 = vmatpush1.xpose.msra.mxu0 0.0
    %2510 = vmatprep.subr.mxu0 0.0
    %2511 = vmatpush1.xpose.msra.mxu0 0.0
    %2512 = vmatprep.subr.mxu0 0.0
    %2513 = vmatpush1.xpose.msra.mxu0 0.0
    %2514 = vmatprep.subr.mxu0 0.0
    %2515 = vmatpush1.xpose.msra.mxu0 0.0
    %2516 = vmatprep.subr.mxu0 0.0
    %2517 = vmatpush1.xpose.msra.mxu0 0.0
    %2518 = vmatprep.subr.mxu0 0.0
    %2519 = vmatpush1.xpose.msra.mxu0 0.0
    %2520 = vmatprep.subr.mxu0 0.0
    %2521 = vmatpush1.xpose.msra.mxu0 0.0
    %2522 = vmatprep.subr.mxu0 0.0
    %2523 = vmatpush1.xpose.msra.mxu0 0.0
    %2524 = vmatprep.subr.mxu0 0.0
    %2525 = vmatpush1.xpose.msra.mxu0 0.0
    %2526 = vmatprep.subr.mxu0 0.0
    %2527 = vmatpush1.xpose.msra.mxu0 0.0
    %2528 = vmatprep.subr.mxu0 0.0
    %2529 = vmatpush1.xpose.msra.mxu0 0.0
    %2530 = vmatprep.subr.mxu0 0.0
    %2531 = vmatpush1.xpose.msra.mxu0 0.0
    %2532 = vmatprep.subr.mxu0 0.0
    %2533 = vmatpush1.xpose.msra.mxu0 0.0
    %2534 = vmatprep.subr.mxu0 0.0
    %2535 = vmatpush1.xpose.msra.mxu0 0.0
    %2536 = vmatprep.subr.mxu0 0.0
    %2537 = vmatpush1.xpose.msra.mxu0 0.0
    %2538 = vmatprep.subr.mxu0 0.0
    %2539 = vmatpush1.xpose.msra.mxu0 0.0
    %2540 = vmatprep.subr.mxu0 0.0
    %2541 = vmatpush1.xpose.msra.mxu0 0.0
    %2542 = vmatprep.subr.mxu0 0.0
    %2543 = vmatpush1.xpose.msra.mxu0 0.0
    %2544 = vmatprep.subr.mxu0 0.0
    %2545 = vmatpush1.xpose.msra.mxu0 0.0
    %2546 = vmatprep.subr.mxu0 0.0
    %2547 = vmatpush1.xpose.msra.mxu0 0.0
    %2548 = vmatprep.subr.mxu0 0.0
    %2549 = vmatpush1.xpose.msra.mxu0 0.0
    %2550 = vmatprep.mubr.f32.mxu0 0.0
    %2551 = vmatmul.mubr.f32.gmra.mrb[0].mxu0 1.0
    %v2552 = vpop.f32.mrb[0].mxu0
    %v2553 = vadd.f32 %v2485, %v2552
    %v2554 = vpop.f32.mrb[0].mxu0
    %2555 = vdwg.mxu0
    %2557 = vrot.lane.b32.xlu0 %v2553, 16
    %v2558 = vpop.permute.xlu0 %2557
    %vm2560 = vcmask 188544
    %2561 = vst.msk [vmem:[#allocation14] sm:$0x1] %vm2560, %v2558
    // Predicated region
    $region50: #{tpu_custom_call.1} parent=1 // pred_check
      _
    $region51: #{tpu_custom_call.1} parent=1 // pred_check_branch
      %2563 = sbr.rel (0) target = $region53
    $region52: #{tpu_custom_call.1} parent=1 // pred_region
      %s2565 = ssub.s32 16, 16
      %2566 = vsyncadd [#allocation6], %s2565
      %s2568 = sshll.u32 [#allocation14], 4
      %s2569 = int_to_ptr.vmem [resolvable:$true] %s2568
      %2571 = dma.vmem_to_hbm [thread:$0]  %s2569, 16, %s7, [#allocation6]
    $region53: #{tpu_custom_call.1} parent=1 // pred_fallthru
      _
    // Predicated region
    $region54: #{tpu_custom_call.1} parent=1 // pred_check
      _
    $region55: #{tpu_custom_call.1} parent=1 // pred_check_branch
      %2573 = sbr.rel (0) target = $region57
    $region56: #{tpu_custom_call.1} parent=1 // pred_region
      %2574 = dma.done [#allocation6], 16
    $region57: #{tpu_custom_call.1} parent=1 // pred_fallthru
      _
    %2575 = vsyncpa [#allocation5], 1
    %2576 = vsyncpa [#allocation9], 1
    %2577 = vsyncpa [#allocation12], 1
    %2578 = vsyncpa [#allocation6], 1
    %2579 = vsyncpa [#allocation7], 1
  %2580 = vsyncmov [#allocation3]
  %s2581 = vpop.sfrf %2580
  %p2582 = scmp.eq.s32.totalorder %s2581, 0
  %p2583 = pneg %p2582
  %2585 = shalt.err (%p2583)

</llo_original>
